<compile_context>
chip_gen: v5e
topology: v5e:2x2
jax: 0.10.0
libtpu: 0.0.40
codegen_flags: <defaults>
</compile_context>

<pallas_src>
import functools

import jax
import jax.numpy as jnp
import numpy as np
from jax.experimental import pallas as pl
from jax.experimental.pallas import tpu as pltpu

LN_EPS = 1e-5        # nn.LayerNorm default
NEG_BIG = -1e30      # additive key-padding mask value (stands in for -inf)
LORA_SCALING = 0.1   # LoRALinear default

# Order of the stacked per-layer weights as passed to the fused kernel.
STACK_KEYS = ("wqkv", "bqkv", "wo", "bo", "g1", "be1",
              "w1", "b1", "w2", "b2", "g2", "be2")


def _layernorm(x, g, b):
    mu = jnp.mean(x, axis=-1, keepdims=True)
    var = jnp.mean((x - mu) ** 2, axis=-1, keepdims=True)
    return (x - mu) * jax.lax.rsqrt(var + LN_EPS) * g + b


def _round_up(x, m):
    return ((x + m - 1) // m) * m


def _vmem_limit(nbytes):
    # Cap at 48 MiB so the same request is valid on v7x (64 MiB physical per TC).
    return int(min(48 * 1024 * 1024, max(32 * 1024 * 1024, nbytes)))


# ----------------------------------------------------------------------------
# Pallas kernels
# ----------------------------------------------------------------------------
def transformer_stack_kernel(
    x_ref, bias_ref,
    wqkv_ref, bqkv_ref, wo_ref, bo_ref, g1_ref, be1_ref,
    w1_ref, b1_ref, w2_ref, b2_ref, g2_ref, be2_ref,
    out_ref,
    x_scr,
    *, n_heads, batch, seq,
):
    """All layers, all batch elements.  grid=(L,).  Per-layer weights are streamed
    (double-buffered) exactly once; the flattened (B*S, D) activation stays resident
    in the x_scr VMEM scratch across the whole layer axis."""
    l = pl.program_id(0)
    n_l = pl.num_programs(0)

    @pl.when(l == 0)
    def _():                                    # load the embedded input once
        x_scr[...] = x_ref[...]

    x = x_scr[...]                              # (B*S, D) f32
    R, D = x.shape
    hd = D // n_heads
    bias = bias_ref[...]                        # (B*H, 1, S) additive key-pad bias

    # --- QKV projection: one MXU matmul, M = B*S, N = 3D (q-scale folded) -------
    x_bf = x.astype(jnp.bfloat16)
    qkv = jnp.dot(x_bf, wqkv_ref[0],
                  preferred_element_type=jnp.float32) + bqkv_ref[0]   # (B*S, 3D) f32
    qkv_bf = qkv.astype(jnp.bfloat16)

    def head_slab(base):
        # (B*H, S, hd), batch-major over (b, h); matches the bias / merge ordering.
        return jnp.stack(
            [qkv_bf[b * seq:(b + 1) * seq, base + h * hd: base + (h + 1) * hd]
             for b in range(batch) for h in range(n_heads)], axis=0)

    q3 = head_slab(0)
    k3 = head_slab(D)
    v3 = head_slab(2 * D)

    # --- attention (scores materialized; see TODO for flash tiling) -------------
    s = jnp.einsum("nqe,nke->nqk", q3, k3,
                   preferred_element_type=jnp.float32)                # (B*H, S, S)
    s = s + bias
    s = s - jnp.max(s, axis=-1, keepdims=True)
    p = jnp.exp(s)
    denom = jnp.sum(p, axis=-1, keepdims=True)
    ctx = jnp.einsum("nqk,nke->nqe", p.astype(jnp.bfloat16), v3,
                     preferred_element_type=jnp.float32)              # (B*H, S, hd)
    # Deferred softmax normalization (multiplies on (n,S,hd) instead of (n,S,S)).
    ctx = ctx * pl.reciprocal(denom, approx=True)

    # --- head merge folded into ONE (B*S, D) @ (D, D) out-projection ------------
    attn = jnp.concatenate(
        [jnp.concatenate([ctx[b * n_heads + h] for h in range(n_heads)], axis=-1)
         for b in range(batch)], axis=0)                              # (B*S, D) f32
    o = jnp.dot(attn.astype(jnp.bfloat16), wo_ref[0],
                preferred_element_type=jnp.float32) + bo_ref[0]

    x = _layernorm(x + o, g1_ref[0], be1_ref[0])

    # --- FFN (w1 -> ReLU -> w2), LoRA folded into w1/w2 --------------------------
    h1 = jnp.dot(x.astype(jnp.bfloat16), w1_ref[0],
                 preferred_element_type=jnp.float32) + b1_ref[0]
    h1 = jnp.maximum(h1, 0.0)                   # activation == 'relu'
    h2 = jnp.dot(h1.astype(jnp.bfloat16), w2_ref[0],
                 preferred_element_type=jnp.float32) + b2_ref[0]

    x = _layernorm(x + h2, g2_ref[0], be2_ref[0])
    x_scr[...] = x                              # stays resident in VMEM

    @pl.when(l == n_l - 1)
    def _():                                    # single bf16 HBM writeback
        out_ref[...] = x.astype(out_ref.dtype)


def output_proj_kernel(x_ref, w_ref, b_ref, out_ref):
    """Final vocab projection; rows = flattened B*S, grid=(rows//tM, Vp//tV)."""
    out_ref[...] = jnp.dot(x_ref[...], w_ref[...],
                           preferred_element_type=jnp.float32) + b_ref[...]


# ----------------------------------------------------------------------------
# Wrappers
# ----------------------------------------------------------------------------
def run_transformer_stack(x2, bias3, kp, *, n_heads, batch, seq):
    R, D = x2.shape
    L = kp["wqkv"].shape[0]
    F = kp["w1"].shape[2]
    n = batch * n_heads
    weights = [kp[k] for k in STACK_KEYS]

    def wspec(w):
        zeros = (0,) * (w.ndim - 1)
        return pl.BlockSpec((1,) + w.shape[1:],
                            lambda l, zeros=zeros: (l,) + zeros)

    w_specs = [wspec(w) for w in weights]

    # VMEM budget: double-buffered per-layer weights + resident activation + temps.
    w_block = sum(int(np.prod(w.shape[1:])) * w.dtype.itemsize for w in weights)
    tmp = (R * 3 * D * 6                 # qkv f32 + bf16
           + 3 * R * D * 2               # q3/k3/v3 bf16
           + 2 * n * seq * seq * 4       # scores + probs f32
           + R * D * 14                  # ctx / merged attn / residual temps
           + R * F * 6)                  # ffn hidden f32 + bf16
    vmem_limit = _vmem_limit(2 * w_block + 3 * R * D * 4 + n * seq * 4
                             + tmp + (2 << 20))

    kernel = functools.partial(transformer_stack_kernel,
                               n_heads=n_heads, batch=batch, seq=seq)
    return pl.pallas_call(
        kernel,
        out_shape=jax.ShapeDtypeStruct((R, D), jnp.bfloat16),
        grid_spec=pltpu.PrefetchScalarGridSpec(
            num_scalar_prefetch=0,
            grid=(L,),
            in_specs=[pl.BlockSpec((R, D), lambda l: (0, 0)),
                      pl.BlockSpec((n, 1, seq), lambda l: (0, 0, 0))] + w_specs,
            out_specs=pl.BlockSpec((R, D), lambda l: (0, 0)),
            scratch_shapes=[pltpu.VMEM((R, D), jnp.float32)],
        ),
        compiler_params=pltpu.CompilerParams(
            dimension_semantics=("arbitrary",),
            vmem_limit_bytes=vmem_limit),
    )(x2, bias3, *weights)


def _pick_vocab_tile(Vp):
    for t in (2048, 1024, 512, 256):
        if Vp % t == 0:
            return t
    return Vp


def _pick_row_tile(R):
    for t in (256, 128):
        if R % t == 0:
            return t
    return R


def run_output_proj(x2, w_out, b_out):
    R, D = x2.shape
    Vp = w_out.shape[1]
    tV = _pick_vocab_tile(Vp)
    tM = _pick_row_tile(R)

    vmem_limit = _vmem_limit(
        2 * (D * tV * w_out.dtype.itemsize + tV * 4)
        + 2 * tM * D * x2.dtype.itemsize
        + 3 * tM * tV * 4 + (2 << 20))

    return pl.pallas_call(
        output_proj_kernel,
        out_shape=jax.ShapeDtypeStruct((R, Vp), jnp.float32),
        grid_spec=pltpu.PrefetchScalarGridSpec(
            num_scalar_prefetch=0,
            grid=(R // tM, Vp // tV),
            in_specs=[pl.BlockSpec((tM, D), lambda i, j: (i, 0)),
                      pl.BlockSpec((D, tV), lambda i, j: (0, j)),
                      pl.BlockSpec((1, tV), lambda i, j: (0, j))],
            out_specs=pl.BlockSpec((tM, tV), lambda i, j: (i, j)),
        ),
        compiler_params=pltpu.CompilerParams(
            dimension_semantics=("parallel", "parallel"),
            vmem_limit_bytes=vmem_limit),
    )(x2, w_out, b_out)


def prepare_kernel_params(params, *, n_heads, lora_scaling=LORA_SCALING):
    """Fold LoRA adapters + 1/sqrt(hd) q-scale into the base weights, stack per-layer
    weights along a leading L axis, cast matmul weights to bf16 (biases/LN stay f32),
    and pad the vocab projection to a multiple of 256."""
    layers = params["layers"]
    D = params["embed"].shape[1]
    hd = D // n_heads
    q_scale = 1.0 / float(np.sqrt(hd))

    def stack(fn):
        return jnp.stack([fn(lp) for lp in layers], axis=0)

    def wqkv_scaled(lp):
        w = lp["wqkv"]
        return jnp.concatenate([w[:, :D] * q_scale, w[:, D:]], axis=1)

    def bqkv_scaled(lp):
        b = lp["bqkv"]
        return jnp.concatenate([b[:, :D] * q_scale, b[:, D:]], axis=1)

    def wo_eff(lp):
        return lp["wo"] + (lp["lao"] @ lp["lbo"]) * lora_scaling

    def w1_eff(lp):
        return lp["w1"] + (lp["la1"] @ lp["lb1"]) * lora_scaling

    def w2_eff(lp):
        return lp["w2"] + (lp["la2"] @ lp["lb2"]) * lora_scaling

    V = params["w_out"].shape[1]
    Vp = _round_up(V, 256)
    w_out = jnp.pad(params["w_out"], ((0, 0), (0, Vp - V)))
    b_out = jnp.pad(params["b_out"], ((0, 0), (0, Vp - V)))

    return {
        "embed": params["embed"],
        "pos": params["pos"],
        "vocab_size": V,
        "w_out": w_out.astype(jnp.bfloat16),
        "b_out": b_out,
        "wqkv": stack(wqkv_scaled).astype(jnp.bfloat16),
        "bqkv": stack(bqkv_scaled),
        "wo": stack(wo_eff).astype(jnp.bfloat16),
        "bo": stack(lambda lp: lp["bo"]),
        "g1": stack(lambda lp: lp["g1"]),
        "be1": stack(lambda lp: lp["be1"]),
        "w1": stack(w1_eff).astype(jnp.bfloat16),
        "b1": stack(lambda lp: lp["b1"]),
        "w2": stack(w2_eff).astype(jnp.bfloat16),
        "b2": stack(lambda lp: lp["b2"]),
        "g2": stack(lambda lp: lp["g2"]),
        "be2": stack(lambda lp: lp["be2"]),
    }


def student_forward(kparams, input_ids, attention_mask, *, n_heads):
    B, S = input_ids.shape
    D = kparams["embed"].shape[1]
    V = kparams["vocab_size"]
    # Embedding lookups (gather) kept as plain-JAX glue.
    x = kparams["embed"][input_ids] + kparams["pos"][:S][None, :, :]
    x2 = x.reshape(B * S, D).astype(jnp.float32)
    bias = jnp.where(attention_mask == 0, NEG_BIG, 0.0).astype(jnp.float32)  # (B, S)
    bias3 = jnp.repeat(bias[:, None, :], n_heads, axis=0)                    # (B*H,1,S)

    y2 = run_transformer_stack(x2, bias3, kparams,
                               n_heads=n_heads, batch=B, seq=S)              # bf16
    logits2 = run_output_proj(y2, kparams["w_out"], kparams["b_out"])        # (B*S, Vp)
    return logits2[:, :V].reshape(B, S, V)


# ----------------------------------------------------------------------------
# Deterministic parameter construction (synthetic init, no checkpoint load)
# ----------------------------------------------------------------------------
def init_params(key, *, vocab_size, d_model, n_heads, d_ff, n_layers,
                lora_rank, max_seq_len):
    del n_heads  # shapes do not depend on it
    keys = jax.random.split(key, 4 + n_layers)

    def nrm(k, shape, scale=0.02):
        return jax.random.normal(k, shape, jnp.float32) * scale

    params = {
        "embed": nrm(keys[0], (vocab_size, d_model)),
        "pos": nrm(keys[1], (max_seq_len, d_model)),
        "w_out": nrm(keys[2], (d_model, vocab_size)),
        "b_out": nrm(keys[3], (1, vocab_size)),
        "layers": [],
    }
    for i in range(n_layers):
        lk = jax.random.split(keys[4 + i], 14)
        params["layers"].append(dict(
            wqkv=nrm(lk[0], (d_model, 3 * d_model)),
            bqkv=nrm(lk[1], (1, 3 * d_model)),
            wo=nrm(lk[2], (d_model, d_model)),
            bo=nrm(lk[3], (1, d_model)),
            lao=nrm(lk[4], (d_model, lora_rank)),
            lbo=nrm(lk[5], (lora_rank, d_model)),
            g1=jnp.ones((1, d_model), jnp.float32),
            be1=jnp.zeros((1, d_model), jnp.float32),
            w1=nrm(lk[6], (d_model, d_ff)),
            b1=nrm(lk[7], (1, d_ff)),
            la1=nrm(lk[8], (d_model, lora_rank)),
            lb1=nrm(lk[9], (lora_rank, d_ff)),
            w2=nrm(lk[10], (d_ff, d_model)),
            b2=nrm(lk[11], (1, d_model)),
            la2=nrm(lk[12], (d_ff, lora_rank)),
            lb2=nrm(lk[13], (lora_rank, d_model)),
            g2=jnp.ones((1, d_model), jnp.float32),
            be2=jnp.zeros((1, d_model), jnp.float32),
        ))
    return params


# ----------------------------------------------------------------------------
# Pure-JAX f32 reference (explicit LoRA, un-folded) for a correctness check
# ----------------------------------------------------------------------------
def reference_forward(params, input_ids, attention_mask, *, n_heads,
                      lora_scaling=LORA_SCALING):
    B, S = input_ids.shape
    D = params["embed"].shape[1]
    hd = D // n_heads
    x = params["embed"][input_ids] + params["pos"][jnp.arange(S)][None]
    bias = jnp.where(attention_mask == 0, NEG_BIG, 0.0).astype(jnp.float32)
    for lp in params["layers"]:
        qkv = x @ lp["wqkv"] + lp["bqkv"]
        q, k, v = jnp.split(qkv, 3, axis=-1)
        q = q.reshape(B, S, n_heads, hd)
        k = k.reshape(B, S, n_heads, hd)
        v = v.reshape(B, S, n_heads, hd)
        s = jnp.einsum("bqhd,bkhd->bhqk", q, k) / np.sqrt(hd)
        s = s + bias[:, None, None, :]
        p = jax.nn.softmax(s, axis=-1)
        attn = jnp.einsum("bhqk,bkhd->bqhd", p, v).reshape(B, S, D)
        o = attn @ lp["wo"] + lp["bo"] + (attn @ lp["lao"]) @ lp["lbo"] * lora_scaling
        x = _layernorm(x + o, lp["g1"], lp["be1"])
        h1 = x @ lp["w1"] + lp["b1"] + (x @ lp["la1"]) @ lp["lb1"] * lora_scaling
        h1 = jnp.maximum(h1, 0.0)
        h2 = h1 @ lp["w2"] + lp["b2"] + (h1 @ lp["la2"]) @ lp["lb2"] * lora_scaling
        x = _layernorm(x + h2, lp["g2"], lp["be2"])
    return x @ params["w_out"] + params["b_out"]


if __name__ == "__main__":
    # Small config consistent with the module's constructor.
    vocab_size, d_model, n_layers, n_heads = 64, 32, 2, 4
    ffn_rank, lora_rank, max_seq_len = 64, 4, 16
    B, S = 2, 8

    key = jax.random.PRNGKey(0)
    pkey, ikey = jax.random.split(key)
    params = init_params(pkey, vocab_size=vocab_size, d_model=d_model,
                         n_heads=n_heads, d_ff=ffn_rank, n_layers=n_layers,
                         lora_rank=lora_rank, max_seq_len=max_seq_len)
    kparams = prepare_kernel_params(params, n_heads=n_heads)

    input_ids = jax.random.randint(ikey, (B, S), 0, vocab_size, dtype=jnp.int32)
    # Last two positions of each sequence are padding (attention_mask == 0).
    attention_mask = jnp.ones((B, S), jnp.int32).at[:, S - 2:].set(0)

    logits = student_forward(kparams, input_ids, attention_mask, n_heads=n_heads)
    logits = jax.block_until_ready(logits)

    ref = reference_forward(params, input_ids, attention_mask, n_heads=n_heads)
    # bf16 matmuls + bf16 inter-kernel activation + approx-reciprocal softmax
    # vs pure f32 reference.
    np.testing.assert_allclose(np.asarray(logits), np.asarray(ref),
                               rtol=5e-2, atol=2e-2)
    print("KERNEL_OK")
</pallas_src>

<mosaic_0001>
module attributes {stable_mosaic.version = 11 : i64} {
  func.func @transformer_stack_kernel(%arg0: i32, %arg1: memref<16x32xf32, #tpu.memory_space<vmem>>, %arg2: memref<8x1x8xf32, #tpu.memory_space<vmem>>, %arg3: memref<1x32x96xbf16, #tpu.memory_space<vmem>>, %arg4: memref<1x1x96xf32, #tpu.memory_space<vmem>>, %arg5: memref<1x32x32xbf16, #tpu.memory_space<vmem>>, %arg6: memref<1x1x32xf32, #tpu.memory_space<vmem>>, %arg7: memref<1x1x32xf32, #tpu.memory_space<vmem>>, %arg8: memref<1x1x32xf32, #tpu.memory_space<vmem>>, %arg9: memref<1x32x64xbf16, #tpu.memory_space<vmem>>, %arg10: memref<1x1x64xf32, #tpu.memory_space<vmem>>, %arg11: memref<1x64x32xbf16, #tpu.memory_space<vmem>>, %arg12: memref<1x1x32xf32, #tpu.memory_space<vmem>>, %arg13: memref<1x1x32xf32, #tpu.memory_space<vmem>>, %arg14: memref<1x1x32xf32, #tpu.memory_space<vmem>>, %arg15: memref<16x32xbf16, #tpu.memory_space<vmem>>, %arg16: memref<16x32xf32, #tpu.memory_space<vmem>>) attributes {dimension_semantics = [#tpu.dimension_semantics<arbitrary>], iteration_bounds = array<i64: 2>, scalar_prefetch = 0 : i64, scratch_operands = 1 : i64, tpu.core_type = #tpu.core_type<tc>, window_params = [{pipeline_mode = #tpu.pipeline_mode<synchronous>, transform_indices = @transform_0, window_bounds = array<i64: 16, 32>}, {pipeline_mode = #tpu.pipeline_mode<synchronous>, transform_indices = @transform_1, window_bounds = array<i64: 8, 1, 8>}, {transform_indices = @transform_2, window_bounds = array<i64: 1, 32, 96>}, {transform_indices = @transform_3, window_bounds = array<i64: 1, 1, 96>}, {transform_indices = @transform_4, window_bounds = array<i64: 1, 32, 32>}, {transform_indices = @transform_5, window_bounds = array<i64: 1, 1, 32>}, {transform_indices = @transform_6, window_bounds = array<i64: 1, 1, 32>}, {transform_indices = @transform_7, window_bounds = array<i64: 1, 1, 32>}, {transform_indices = @transform_8, window_bounds = array<i64: 1, 32, 64>}, {transform_indices = @transform_9, window_bounds = array<i64: 1, 1, 64>}, {transform_indices = @transform_10, window_bounds = array<i64: 1, 64, 32>}, {transform_indices = @transform_11, window_bounds = array<i64: 1, 1, 32>}, {transform_indices = @transform_12, window_bounds = array<i64: 1, 1, 32>}, {transform_indices = @transform_13, window_bounds = array<i64: 1, 1, 32>}, {pipeline_mode = #tpu.pipeline_mode<synchronous>, transform_indices = @transform_14, window_bounds = array<i64: 16, 32>}]} {
    %c0_i32 = arith.constant 0 : i32
    %0 = arith.cmpi eq, %arg0, %c0_i32 : i32
    %1 = arith.extui %0 : i1 to i32
    %c0_i32_0 = arith.constant 0 : i32
    %2 = arith.cmpi ne, %1, %c0_i32_0 : i32
    scf.if %2 {
      %c0_62 = arith.constant 0 : index
      %c0_63 = arith.constant 0 : index
      %183 = vector.load %arg1[%c0_62, %c0_63] : memref<16x32xf32, #tpu.memory_space<vmem>>, vector<16x32xf32>
      %c0_64 = arith.constant 0 : index
      %c0_65 = arith.constant 0 : index
      %184 = vector.load %arg16[%c0_64, %c0_65] : memref<16x32xf32, #tpu.memory_space<vmem>>, vector<16x32xf32>
      tpu.vector_store %arg16[%c0_64, %c0_65], %183 {strides = array<i32>} : memref<16x32xf32, #tpu.memory_space<vmem>>, vector<16x32xf32>,
    } else {
    }
    %c0 = arith.constant 0 : index
    %c0_1 = arith.constant 0 : index
    %3 = vector.load %arg16[%c0, %c0_1] : memref<16x32xf32, #tpu.memory_space<vmem>>, vector<16x32xf32>
    %c0_2 = arith.constant 0 : index
    %c0_3 = arith.constant 0 : index
    %c0_4 = arith.constant 0 : index
    %4 = vector.load %arg2[%c0_2, %c0_3, %c0_4] : memref<8x1x8xf32, #tpu.memory_space<vmem>>, vector<8x1x8xf32>
    %5 = arith.truncf %3 : vector<16x32xf32> to vector<16x32xbf16>
    %c0_5 = arith.constant 0 : index
    %c0_6 = arith.constant 0 : index
    %c0_7 = arith.constant 0 : index
    %6 = vector.load %arg3[%c0_5, %c0_6, %c0_7] : memref<1x32x96xbf16, #tpu.memory_space<vmem>>, vector<1x32x96xbf16>
    %7 = vector.shape_cast %6 : vector<1x32x96xbf16> to vector<32x96xbf16>
    %cst = arith.constant dense<0.000000e+00> : vector<16x96xf32>
    %8 = tpu.matmul %5, %7, %cst {dimension_numbers = #tpu.dot_dimension_numbers<[1], [0], [0], [1], [0, 0, 1, 1], [], []>} : vector<16x32xbf16>, vector<32x96xbf16>, vector<16x96xf32> -> vector<16x96xf32>
    %c0_8 = arith.constant 0 : index
    %c0_9 = arith.constant 0 : index
    %c0_10 = arith.constant 0 : index
    %9 = vector.load %arg4[%c0_8, %c0_9, %c0_10] : memref<1x1x96xf32, #tpu.memory_space<vmem>>, vector<1x1x96xf32>
    %10 = vector.shape_cast %9 : vector<1x1x96xf32> to vector<1x96xf32>
    %11 = vector.broadcast %10 : vector<1x96xf32> to vector<16x96xf32>
    %12 = arith.addf %8, %11 : vector<16x96xf32>
    %13 = arith.truncf %12 : vector<16x96xf32> to vector<16x96xbf16>
    %14 = vector.extract_strided_slice %13 {offsets = [0, 0], sizes = [8, 8], strides = [1, 1]} : vector<16x96xbf16> to vector<8x8xbf16>
    %15 = vector.extract_strided_slice %13 {offsets = [0, 8], sizes = [8, 8], strides = [1, 1]} : vector<16x96xbf16> to vector<8x8xbf16>
    %16 = vector.extract_strided_slice %13 {offsets = [0, 16], sizes = [8, 8], strides = [1, 1]} : vector<16x96xbf16> to vector<8x8xbf16>
    %17 = vector.extract_strided_slice %13 {offsets = [0, 24], sizes = [8, 8], strides = [1, 1]} : vector<16x96xbf16> to vector<8x8xbf16>
    %18 = vector.extract_strided_slice %13 {offsets = [8, 0], sizes = [8, 8], strides = [1, 1]} : vector<16x96xbf16> to vector<8x8xbf16>
    %19 = vector.extract_strided_slice %13 {offsets = [8, 8], sizes = [8, 8], strides = [1, 1]} : vector<16x96xbf16> to vector<8x8xbf16>
    %20 = vector.extract_strided_slice %13 {offsets = [8, 16], sizes = [8, 8], strides = [1, 1]} : vector<16x96xbf16> to vector<8x8xbf16>
    %21 = vector.extract_strided_slice %13 {offsets = [8, 24], sizes = [8, 8], strides = [1, 1]} : vector<16x96xbf16> to vector<8x8xbf16>
    %22 = vector.shape_cast %14 : vector<8x8xbf16> to vector<1x8x8xbf16>
    %23 = vector.shape_cast %15 : vector<8x8xbf16> to vector<1x8x8xbf16>
    %24 = vector.shape_cast %16 : vector<8x8xbf16> to vector<1x8x8xbf16>
    %25 = vector.shape_cast %17 : vector<8x8xbf16> to vector<1x8x8xbf16>
    %26 = vector.shape_cast %18 : vector<8x8xbf16> to vector<1x8x8xbf16>
    %27 = vector.shape_cast %19 : vector<8x8xbf16> to vector<1x8x8xbf16>
    %28 = vector.shape_cast %20 : vector<8x8xbf16> to vector<1x8x8xbf16>
    %29 = vector.shape_cast %21 : vector<8x8xbf16> to vector<1x8x8xbf16>
    %30 = tpu.concatenate %22, %23, %24, %25, %26, %27, %28, %29 in 0 : vector<1x8x8xbf16>, vector<1x8x8xbf16>, vector<1x8x8xbf16>, vector<1x8x8xbf16>, vector<1x8x8xbf16>, vector<1x8x8xbf16>, vector<1x8x8xbf16>, vector<1x8x8xbf16> -> vector<8x8x8xbf16>
    %31 = vector.extract_strided_slice %13 {offsets = [0, 32], sizes = [8, 8], strides = [1, 1]} : vector<16x96xbf16> to vector<8x8xbf16>
    %32 = vector.extract_strided_slice %13 {offsets = [0, 40], sizes = [8, 8], strides = [1, 1]} : vector<16x96xbf16> to vector<8x8xbf16>
    %33 = vector.extract_strided_slice %13 {offsets = [0, 48], sizes = [8, 8], strides = [1, 1]} : vector<16x96xbf16> to vector<8x8xbf16>
    %34 = vector.extract_strided_slice %13 {offsets = [0, 56], sizes = [8, 8], strides = [1, 1]} : vector<16x96xbf16> to vector<8x8xbf16>
    %35 = vector.extract_strided_slice %13 {offsets = [8, 32], sizes = [8, 8], strides = [1, 1]} : vector<16x96xbf16> to vector<8x8xbf16>
    %36 = vector.extract_strided_slice %13 {offsets = [8, 40], sizes = [8, 8], strides = [1, 1]} : vector<16x96xbf16> to vector<8x8xbf16>
    %37 = vector.extract_strided_slice %13 {offsets = [8, 48], sizes = [8, 8], strides = [1, 1]} : vector<16x96xbf16> to vector<8x8xbf16>
    %38 = vector.extract_strided_slice %13 {offsets = [8, 56], sizes = [8, 8], strides = [1, 1]} : vector<16x96xbf16> to vector<8x8xbf16>
    %39 = vector.shape_cast %31 : vector<8x8xbf16> to vector<1x8x8xbf16>
    %40 = vector.shape_cast %32 : vector<8x8xbf16> to vector<1x8x8xbf16>
    %41 = vector.shape_cast %33 : vector<8x8xbf16> to vector<1x8x8xbf16>
    %42 = vector.shape_cast %34 : vector<8x8xbf16> to vector<1x8x8xbf16>
    %43 = vector.shape_cast %35 : vector<8x8xbf16> to vector<1x8x8xbf16>
    %44 = vector.shape_cast %36 : vector<8x8xbf16> to vector<1x8x8xbf16>
    %45 = vector.shape_cast %37 : vector<8x8xbf16> to vector<1x8x8xbf16>
    %46 = vector.shape_cast %38 : vector<8x8xbf16> to vector<1x8x8xbf16>
    %47 = tpu.concatenate %39, %40, %41, %42, %43, %44, %45, %46 in 0 : vector<1x8x8xbf16>, vector<1x8x8xbf16>, vector<1x8x8xbf16>, vector<1x8x8xbf16>, vector<1x8x8xbf16>, vector<1x8x8xbf16>, vector<1x8x8xbf16>, vector<1x8x8xbf16> -> vector<8x8x8xbf16>
    %48 = vector.extract_strided_slice %13 {offsets = [0, 64], sizes = [8, 8], strides = [1, 1]} : vector<16x96xbf16> to vector<8x8xbf16>
    %49 = vector.extract_strided_slice %13 {offsets = [0, 72], sizes = [8, 8], strides = [1, 1]} : vector<16x96xbf16> to vector<8x8xbf16>
    %50 = vector.extract_strided_slice %13 {offsets = [0, 80], sizes = [8, 8], strides = [1, 1]} : vector<16x96xbf16> to vector<8x8xbf16>
    %51 = vector.extract_strided_slice %13 {offsets = [0, 88], sizes = [8, 8], strides = [1, 1]} : vector<16x96xbf16> to vector<8x8xbf16>
    %52 = vector.extract_strided_slice %13 {offsets = [8, 64], sizes = [8, 8], strides = [1, 1]} : vector<16x96xbf16> to vector<8x8xbf16>
    %53 = vector.extract_strided_slice %13 {offsets = [8, 72], sizes = [8, 8], strides = [1, 1]} : vector<16x96xbf16> to vector<8x8xbf16>
    %54 = vector.extract_strided_slice %13 {offsets = [8, 80], sizes = [8, 8], strides = [1, 1]} : vector<16x96xbf16> to vector<8x8xbf16>
    %55 = vector.extract_strided_slice %13 {offsets = [8, 88], sizes = [8, 8], strides = [1, 1]} : vector<16x96xbf16> to vector<8x8xbf16>
    %56 = vector.shape_cast %48 : vector<8x8xbf16> to vector<1x8x8xbf16>
    %57 = vector.shape_cast %49 : vector<8x8xbf16> to vector<1x8x8xbf16>
    %58 = vector.shape_cast %50 : vector<8x8xbf16> to vector<1x8x8xbf16>
    %59 = vector.shape_cast %51 : vector<8x8xbf16> to vector<1x8x8xbf16>
    %60 = vector.shape_cast %52 : vector<8x8xbf16> to vector<1x8x8xbf16>
    %61 = vector.shape_cast %53 : vector<8x8xbf16> to vector<1x8x8xbf16>
    %62 = vector.shape_cast %54 : vector<8x8xbf16> to vector<1x8x8xbf16>
    %63 = vector.shape_cast %55 : vector<8x8xbf16> to vector<1x8x8xbf16>
    %64 = tpu.concatenate %56, %57, %58, %59, %60, %61, %62, %63 in 0 : vector<1x8x8xbf16>, vector<1x8x8xbf16>, vector<1x8x8xbf16>, vector<1x8x8xbf16>, vector<1x8x8xbf16>, vector<1x8x8xbf16>, vector<1x8x8xbf16>, vector<1x8x8xbf16> -> vector<8x8x8xbf16>
    "tpu.trace_start"() <{level = 10 : i32, message = "nqe,nke->nqk"}> : () -> ()
    %cst_11 = arith.constant dense<0.000000e+00> : vector<8x8x8xf32>
    %65 = tpu.matmul %30, %47, %cst_11 {dimension_numbers = #tpu.dot_dimension_numbers<[2], [2], [1], [1], [0, 0, 0, 1, 1, 1], [0], [0]>} : vector<8x8x8xbf16>, vector<8x8x8xbf16>, vector<8x8x8xf32> -> vector<8x8x8xf32>
    "tpu.trace_stop"() : () -> ()
    %66 = vector.broadcast %4 : vector<8x1x8xf32> to vector<8x8x8xf32>
    %67 = arith.addf %65, %66 : vector<8x8x8xf32>
    %cst_12 = arith.constant dense<0xFF800000> : vector<8x8xf32>
    %68 = vector.multi_reduction <maximumf>, %67, %cst_12 [2] : vector<8x8x8xf32> to vector<8x8xf32>
    %69 = vector.shape_cast %68 : vector<8x8xf32> to vector<8x8x1xf32>
    %70 = vector.broadcast %69 : vector<8x8x1xf32> to vector<8x8x8xf32>
    %71 = arith.subf %67, %70 : vector<8x8x8xf32>
    %72 = math.exp %71 : vector<8x8x8xf32>
    %cst_13 = arith.constant dense<0.000000e+00> : vector<8x8xf32>
    %73 = vector.multi_reduction <add>, %72, %cst_13 [2] : vector<8x8x8xf32> to vector<8x8xf32>
    %74 = vector.shape_cast %73 : vector<8x8xf32> to vector<8x8x1xf32>
    %75 = arith.truncf %72 : vector<8x8x8xf32> to vector<8x8x8xbf16>
    "tpu.trace_start"() <{level = 10 : i32, message = "nqk,nke->nqe"}> : () -> ()
    %cst_14 = arith.constant dense<0.000000e+00> : vector<8x8x8xf32>
    %76 = tpu.matmul %75, %64, %cst_14 {dimension_numbers = #tpu.dot_dimension_numbers<[2], [1], [1], [2], [0, 0, 0, 1, 1, 2], [0], [0]>} : vector<8x8x8xbf16>, vector<8x8x8xbf16>, vector<8x8x8xf32> -> vector<8x8x8xf32>
    "tpu.trace_stop"() : () -> ()
    %77 = tpu.reciprocal %74 {approx = true} : vector<8x8x1xf32> -> vector<8x8x1xf32>
    %78 = vector.broadcast %77 : vector<8x8x1xf32> to vector<8x8x8xf32>
    %79 = arith.mulf %76, %78 : vector<8x8x8xf32>
    %80 = vector.extract_strided_slice %79 {offsets = [0, 0, 0], sizes = [1, 8, 8], strides = [1, 1, 1]} : vector<8x8x8xf32> to vector<1x8x8xf32>
    %81 = vector.shape_cast %80 : vector<1x8x8xf32> to vector<8x8xf32>
    %82 = vector.extract_strided_slice %79 {offsets = [1, 0, 0], sizes = [1, 8, 8], strides = [1, 1, 1]} : vector<8x8x8xf32> to vector<1x8x8xf32>
    %83 = vector.shape_cast %82 : vector<1x8x8xf32> to vector<8x8xf32>
    %84 = vector.extract_strided_slice %79 {offsets = [2, 0, 0], sizes = [1, 8, 8], strides = [1, 1, 1]} : vector<8x8x8xf32> to vector<1x8x8xf32>
    %85 = vector.shape_cast %84 : vector<1x8x8xf32> to vector<8x8xf32>
    %86 = vector.extract_strided_slice %79 {offsets = [3, 0, 0], sizes = [1, 8, 8], strides = [1, 1, 1]} : vector<8x8x8xf32> to vector<1x8x8xf32>
    %87 = vector.shape_cast %86 : vector<1x8x8xf32> to vector<8x8xf32>
    %88 = tpu.concatenate %81, %83, %85, %87 in 1 : vector<8x8xf32>, vector<8x8xf32>, vector<8x8xf32>, vector<8x8xf32> -> vector<8x32xf32>
    %89 = vector.extract_strided_slice %79 {offsets = [4, 0, 0], sizes = [1, 8, 8], strides = [1, 1, 1]} : vector<8x8x8xf32> to vector<1x8x8xf32>
    %90 = vector.shape_cast %89 : vector<1x8x8xf32> to vector<8x8xf32>
    %91 = vector.extract_strided_slice %79 {offsets = [5, 0, 0], sizes = [1, 8, 8], strides = [1, 1, 1]} : vector<8x8x8xf32> to vector<1x8x8xf32>
    %92 = vector.shape_cast %91 : vector<1x8x8xf32> to vector<8x8xf32>
    %93 = vector.extract_strided_slice %79 {offsets = [6, 0, 0], sizes = [1, 8, 8], strides = [1, 1, 1]} : vector<8x8x8xf32> to vector<1x8x8xf32>
    %94 = vector.shape_cast %93 : vector<1x8x8xf32> to vector<8x8xf32>
    %95 = vector.extract_strided_slice %79 {offsets = [7, 0, 0], sizes = [1, 8, 8], strides = [1, 1, 1]} : vector<8x8x8xf32> to vector<1x8x8xf32>
    %96 = vector.shape_cast %95 : vector<1x8x8xf32> to vector<8x8xf32>
    %97 = tpu.concatenate %90, %92, %94, %96 in 1 : vector<8x8xf32>, vector<8x8xf32>, vector<8x8xf32>, vector<8x8xf32> -> vector<8x32xf32>
    %98 = tpu.concatenate %88, %97 in 0 : vector<8x32xf32>, vector<8x32xf32> -> vector<16x32xf32>
    %99 = arith.truncf %98 : vector<16x32xf32> to vector<16x32xbf16>
    %c0_15 = arith.constant 0 : index
    %c0_16 = arith.constant 0 : index
    %c0_17 = arith.constant 0 : index
    %100 = vector.load %arg5[%c0_15, %c0_16, %c0_17] : memref<1x32x32xbf16, #tpu.memory_space<vmem>>, vector<1x32x32xbf16>
    %101 = vector.shape_cast %100 : vector<1x32x32xbf16> to vector<32x32xbf16>
    %cst_18 = arith.constant dense<0.000000e+00> : vector<16x32xf32>
    %102 = tpu.matmul %99, %101, %cst_18 {dimension_numbers = #tpu.dot_dimension_numbers<[1], [0], [0], [1], [0, 0, 1, 1], [], []>} : vector<16x32xbf16>, vector<32x32xbf16>, vector<16x32xf32> -> vector<16x32xf32>
    %c0_19 = arith.constant 0 : index
    %c0_20 = arith.constant 0 : index
    %c0_21 = arith.constant 0 : index
    %103 = vector.load %arg6[%c0_19, %c0_20, %c0_21] : memref<1x1x32xf32, #tpu.memory_space<vmem>>, vector<1x1x32xf32>
    %104 = vector.shape_cast %103 : vector<1x1x32xf32> to vector<1x32xf32>
    %105 = vector.broadcast %104 : vector<1x32xf32> to vector<16x32xf32>
    %106 = arith.addf %102, %105 : vector<16x32xf32>
    %107 = arith.addf %3, %106 : vector<16x32xf32>
    %c0_22 = arith.constant 0 : index
    %c0_23 = arith.constant 0 : index
    %c0_24 = arith.constant 0 : index
    %108 = vector.load %arg7[%c0_22, %c0_23, %c0_24] : memref<1x1x32xf32, #tpu.memory_space<vmem>>, vector<1x1x32xf32>
    %109 = vector.shape_cast %108 : vector<1x1x32xf32> to vector<1x32xf32>
    %c0_25 = arith.constant 0 : index
    %c0_26 = arith.constant 0 : index
    %c0_27 = arith.constant 0 : index
    %110 = vector.load %arg8[%c0_25, %c0_26, %c0_27] : memref<1x1x32xf32, #tpu.memory_space<vmem>>, vector<1x1x32xf32>
    %111 = vector.shape_cast %110 : vector<1x1x32xf32> to vector<1x32xf32>
    %cst_28 = arith.constant dense<0.000000e+00> : vector<16xf32>
    %112 = vector.multi_reduction <add>, %107, %cst_28 [1] : vector<16x32xf32> to vector<16xf32>
    %113 = vector.shape_cast %112 : vector<16xf32> to vector<16x1xf32>
    %cst_29 = arith.constant 3.200000e+01 : f32
    %114 = vector.broadcast %cst_29 : f32 to vector<16x1xf32>
    %115 = arith.divf %113, %114 : vector<16x1xf32>
    %116 = vector.broadcast %115 : vector<16x1xf32> to vector<16x32xf32>
    %117 = arith.subf %107, %116 : vector<16x32xf32>
    %118 = arith.mulf %117, %117 : vector<16x32xf32>
    %cst_30 = arith.constant dense<0.000000e+00> : vector<16xf32>
    %119 = vector.multi_reduction <add>, %118, %cst_30 [1] : vector<16x32xf32> to vector<16xf32>
    %120 = vector.shape_cast %119 : vector<16xf32> to vector<16x1xf32>
    %cst_31 = arith.constant 3.200000e+01 : f32
    %121 = vector.broadcast %cst_31 : f32 to vector<16x1xf32>
    %122 = arith.divf %120, %121 : vector<16x1xf32>
    %123 = vector.broadcast %115 : vector<16x1xf32> to vector<16x32xf32>
    %124 = arith.subf %107, %123 : vector<16x32xf32>
    %cst_32 = arith.constant 9.99999974E-6 : f32
    %125 = vector.broadcast %cst_32 : f32 to vector<16x1xf32>
    %126 = arith.addf %122, %125 : vector<16x1xf32>
    %127 = math.rsqrt %126 : vector<16x1xf32>
    %128 = vector.broadcast %127 : vector<16x1xf32> to vector<16x32xf32>
    %129 = arith.mulf %124, %128 : vector<16x32xf32>
    %130 = vector.broadcast %109 : vector<1x32xf32> to vector<16x32xf32>
    %131 = arith.mulf %129, %130 : vector<16x32xf32>
    %132 = vector.broadcast %111 : vector<1x32xf32> to vector<16x32xf32>
    %133 = arith.addf %131, %132 : vector<16x32xf32>
    %134 = arith.truncf %133 : vector<16x32xf32> to vector<16x32xbf16>
    %c0_33 = arith.constant 0 : index
    %c0_34 = arith.constant 0 : index
    %c0_35 = arith.constant 0 : index
    %135 = vector.load %arg9[%c0_33, %c0_34, %c0_35] : memref<1x32x64xbf16, #tpu.memory_space<vmem>>, vector<1x32x64xbf16>
    %136 = vector.shape_cast %135 : vector<1x32x64xbf16> to vector<32x64xbf16>
    %cst_36 = arith.constant dense<0.000000e+00> : vector<16x64xf32>
    %137 = tpu.matmul %134, %136, %cst_36 {dimension_numbers = #tpu.dot_dimension_numbers<[1], [0], [0], [1], [0, 0, 1, 1], [], []>} : vector<16x32xbf16>, vector<32x64xbf16>, vector<16x64xf32> -> vector<16x64xf32>
    %c0_37 = arith.constant 0 : index
    %c0_38 = arith.constant 0 : index
    %c0_39 = arith.constant 0 : index
    %138 = vector.load %arg10[%c0_37, %c0_38, %c0_39] : memref<1x1x64xf32, #tpu.memory_space<vmem>>, vector<1x1x64xf32>
    %139 = vector.shape_cast %138 : vector<1x1x64xf32> to vector<1x64xf32>
    %140 = vector.broadcast %139 : vector<1x64xf32> to vector<16x64xf32>
    %141 = arith.addf %137, %140 : vector<16x64xf32>
    %cst_40 = arith.constant 0.000000e+00 : f32
    %142 = vector.broadcast %cst_40 : f32 to vector<16x64xf32>
    %143 = arith.maximumf %141, %142 : vector<16x64xf32>
    %144 = arith.truncf %143 : vector<16x64xf32> to vector<16x64xbf16>
    %c0_41 = arith.constant 0 : index
    %c0_42 = arith.constant 0 : index
    %c0_43 = arith.constant 0 : index
    %145 = vector.load %arg11[%c0_41, %c0_42, %c0_43] : memref<1x64x32xbf16, #tpu.memory_space<vmem>>, vector<1x64x32xbf16>
    %146 = vector.shape_cast %145 : vector<1x64x32xbf16> to vector<64x32xbf16>
    %cst_44 = arith.constant dense<0.000000e+00> : vector<16x32xf32>
    %147 = tpu.matmul %144, %146, %cst_44 {dimension_numbers = #tpu.dot_dimension_numbers<[1], [0], [0], [1], [0, 0, 1, 1], [], []>} : vector<16x64xbf16>, vector<64x32xbf16>, vector<16x32xf32> -> vector<16x32xf32>
    %c0_45 = arith.constant 0 : index
    %c0_46 = arith.constant 0 : index
    %c0_47 = arith.constant 0 : index
    %148 = vector.load %arg12[%c0_45, %c0_46, %c0_47] : memref<1x1x32xf32, #tpu.memory_space<vmem>>, vector<1x1x32xf32>
    %149 = vector.shape_cast %148 : vector<1x1x32xf32> to vector<1x32xf32>
    %150 = vector.broadcast %149 : vector<1x32xf32> to vector<16x32xf32>
    %151 = arith.addf %147, %150 : vector<16x32xf32>
    %152 = arith.addf %133, %151 : vector<16x32xf32>
    %c0_48 = arith.constant 0 : index
    %c0_49 = arith.constant 0 : index
    %c0_50 = arith.constant 0 : index
    %153 = vector.load %arg13[%c0_48, %c0_49, %c0_50] : memref<1x1x32xf32, #tpu.memory_space<vmem>>, vector<1x1x32xf32>
    %154 = vector.shape_cast %153 : vector<1x1x32xf32> to vector<1x32xf32>
    %c0_51 = arith.constant 0 : index
    %c0_52 = arith.constant 0 : index
    %c0_53 = arith.constant 0 : index
    %155 = vector.load %arg14[%c0_51, %c0_52, %c0_53] : memref<1x1x32xf32, #tpu.memory_space<vmem>>, vector<1x1x32xf32>
    %156 = vector.shape_cast %155 : vector<1x1x32xf32> to vector<1x32xf32>
    %cst_54 = arith.constant dense<0.000000e+00> : vector<16xf32>
    %157 = vector.multi_reduction <add>, %152, %cst_54 [1] : vector<16x32xf32> to vector<16xf32>
    %158 = vector.shape_cast %157 : vector<16xf32> to vector<16x1xf32>
    %cst_55 = arith.constant 3.200000e+01 : f32
    %159 = vector.broadcast %cst_55 : f32 to vector<16x1xf32>
    %160 = arith.divf %158, %159 : vector<16x1xf32>
    %161 = vector.broadcast %160 : vector<16x1xf32> to vector<16x32xf32>
    %162 = arith.subf %152, %161 : vector<16x32xf32>
    %163 = arith.mulf %162, %162 : vector<16x32xf32>
    %cst_56 = arith.constant dense<0.000000e+00> : vector<16xf32>
    %164 = vector.multi_reduction <add>, %163, %cst_56 [1] : vector<16x32xf32> to vector<16xf32>
    %165 = vector.shape_cast %164 : vector<16xf32> to vector<16x1xf32>
    %cst_57 = arith.constant 3.200000e+01 : f32
    %166 = vector.broadcast %cst_57 : f32 to vector<16x1xf32>
    %167 = arith.divf %165, %166 : vector<16x1xf32>
    %168 = vector.broadcast %160 : vector<16x1xf32> to vector<16x32xf32>
    %169 = arith.subf %152, %168 : vector<16x32xf32>
    %cst_58 = arith.constant 9.99999974E-6 : f32
    %170 = vector.broadcast %cst_58 : f32 to vector<16x1xf32>
    %171 = arith.addf %167, %170 : vector<16x1xf32>
    %172 = math.rsqrt %171 : vector<16x1xf32>
    %173 = vector.broadcast %172 : vector<16x1xf32> to vector<16x32xf32>
    %174 = arith.mulf %169, %173 : vector<16x32xf32>
    %175 = vector.broadcast %154 : vector<1x32xf32> to vector<16x32xf32>
    %176 = arith.mulf %174, %175 : vector<16x32xf32>
    %177 = vector.broadcast %156 : vector<1x32xf32> to vector<16x32xf32>
    %178 = arith.addf %176, %177 : vector<16x32xf32>
    %c0_59 = arith.constant 0 : index
    %c0_60 = arith.constant 0 : index
    %179 = vector.load %arg16[%c0_59, %c0_60] : memref<16x32xf32, #tpu.memory_space<vmem>>, vector<16x32xf32>
    tpu.vector_store %arg16[%c0_59, %c0_60], %178 {strides = array<i32>} : memref<16x32xf32, #tpu.memory_space<vmem>>, vector<16x32xf32>,
    %c1_i32 = arith.constant 1 : i32
    %180 = arith.cmpi eq, %arg0, %c1_i32 : i32
    %181 = arith.extui %180 : i1 to i32
    %c0_i32_61 = arith.constant 0 : i32
    %182 = arith.cmpi ne, %181, %c0_i32_61 : i32
    scf.if %182 {
      %183 = arith.truncf %178 : vector<16x32xf32> to vector<16x32xbf16>
      %c0_62 = arith.constant 0 : index
      %c0_63 = arith.constant 0 : index
      %184 = vector.load %arg15[%c0_62, %c0_63] : memref<16x32xbf16, #tpu.memory_space<vmem>>, vector<16x32xbf16>
      tpu.vector_store %arg15[%c0_62, %c0_63], %183 {strides = array<i32>} : memref<16x32xbf16, #tpu.memory_space<vmem>>, vector<16x32xbf16>,
    } else {
    }
    return
  }
  func.func @transform_0(%arg0: i32) -> (i32, i32) {
    %c0_i32 = arith.constant 0 : i32
    %c0_i32_0 = arith.constant 0 : i32
    %c0_i32_1 = arith.constant 0 : i32
    return %c0_i32, %c0_i32_0 : i32, i32
  }
  func.func @transform_1(%arg0: i32) -> (i32, i32, i32) {
    %c0_i32 = arith.constant 0 : i32
    %c0_i32_0 = arith.constant 0 : i32
    %c0_i32_1 = arith.constant 0 : i32
    %c0_i32_2 = arith.constant 0 : i32
    return %c0_i32, %c0_i32_0, %c0_i32_1 : i32, i32, i32
  }
  func.func @transform_2(%arg0: i32) -> (i32, i32, i32) {
    %c0_i32 = arith.constant 0 : i32
    %c0_i32_0 = arith.constant 0 : i32
    %c0_i32_1 = arith.constant 0 : i32
    return %arg0, %c0_i32, %c0_i32_0 : i32, i32, i32
  }
  func.func @transform_3(%arg0: i32) -> (i32, i32, i32) {
    %c0_i32 = arith.constant 0 : i32
    %c0_i32_0 = arith.constant 0 : i32
    %c0_i32_1 = arith.constant 0 : i32
    return %arg0, %c0_i32, %c0_i32_0 : i32, i32, i32
  }
  func.func @transform_4(%arg0: i32) -> (i32, i32, i32) {
    %c0_i32 = arith.constant 0 : i32
    %c0_i32_0 = arith.constant 0 : i32
    %c0_i32_1 = arith.constant 0 : i32
    return %arg0, %c0_i32, %c0_i32_0 : i32, i32, i32
  }
  func.func @transform_5(%arg0: i32) -> (i32, i32, i32) {
    %c0_i32 = arith.constant 0 : i32
    %c0_i32_0 = arith.constant 0 : i32
    %c0_i32_1 = arith.constant 0 : i32
    return %arg0, %c0_i32, %c0_i32_0 : i32, i32, i32
  }
  func.func @transform_6(%arg0: i32) -> (i32, i32, i32) {
    %c0_i32 = arith.constant 0 : i32
    %c0_i32_0 = arith.constant 0 : i32
    %c0_i32_1 = arith.constant 0 : i32
    return %arg0, %c0_i32, %c0_i32_0 : i32, i32, i32
  }
  func.func @transform_7(%arg0: i32) -> (i32, i32, i32) {
    %c0_i32 = arith.constant 0 : i32
    %c0_i32_0 = arith.constant 0 : i32
    %c0_i32_1 = arith.constant 0 : i32
    return %arg0, %c0_i32, %c0_i32_0 : i32, i32, i32
  }
  func.func @transform_8(%arg0: i32) -> (i32, i32, i32) {
    %c0_i32 = arith.constant 0 : i32
    %c0_i32_0 = arith.constant 0 : i32
    %c0_i32_1 = arith.constant 0 : i32
    return %arg0, %c0_i32, %c0_i32_0 : i32, i32, i32
  }
  func.func @transform_9(%arg0: i32) -> (i32, i32, i32) {
    %c0_i32 = arith.constant 0 : i32
    %c0_i32_0 = arith.constant 0 : i32
    %c0_i32_1 = arith.constant 0 : i32
    return %arg0, %c0_i32, %c0_i32_0 : i32, i32, i32
  }
  func.func @transform_10(%arg0: i32) -> (i32, i32, i32) {
    %c0_i32 = arith.constant 0 : i32
    %c0_i32_0 = arith.constant 0 : i32
    %c0_i32_1 = arith.constant 0 : i32
    return %arg0, %c0_i32, %c0_i32_0 : i32, i32, i32
  }
  func.func @transform_11(%arg0: i32) -> (i32, i32, i32) {
    %c0_i32 = arith.constant 0 : i32
    %c0_i32_0 = arith.constant 0 : i32
    %c0_i32_1 = arith.constant 0 : i32
    return %arg0, %c0_i32, %c0_i32_0 : i32, i32, i32
  }
  func.func @transform_12(%arg0: i32) -> (i32, i32, i32) {
    %c0_i32 = arith.constant 0 : i32
    %c0_i32_0 = arith.constant 0 : i32
    %c0_i32_1 = arith.constant 0 : i32
    return %arg0, %c0_i32, %c0_i32_0 : i32, i32, i32
  }
  func.func @transform_13(%arg0: i32) -> (i32, i32, i32) {
    %c0_i32 = arith.constant 0 : i32
    %c0_i32_0 = arith.constant 0 : i32
    %c0_i32_1 = arith.constant 0 : i32
    return %arg0, %c0_i32, %c0_i32_0 : i32, i32, i32
  }
  func.func @transform_14(%arg0: i32) -> (i32, i32) {
    %c0_i32 = arith.constant 0 : i32
    %c0_i32_0 = arith.constant 0 : i32
    %c0_i32_1 = arith.constant 0 : i32
    return %c0_i32, %c0_i32_0 : i32, i32
  }
}

</mosaic_0001>

<llo_original>
// kernel: tpu_custom_call.1
$region0: #{tpu_custom_call.1}
  #allocation0 [shape = 'u32[]', space=smem, size = 0x4, offset = 0x4, fixed_abs, tag = 'smem constant byte address 0x4 - core index']
  #allocation1 [shape = 'u32[72,128]{1,0:T(1,128)}', space=vmem, size = 0x9000, scoped, tag = 'internal scratch']
  #allocation2 [shape = 'f32[16,32]{1,0:T(8,128)}', space=vmem, size = 0x2000, scoped, tag = 'scratch operand']
  %s0 = inlined_call_operand.hbm [shape: f32[16,32], index: 0, kind: input, shape index: {}]
  %s1 = inlined_call_operand.hbm [shape: f32[8,1,8], index: 1, kind: input, shape index: {}]
  %s2 = inlined_call_operand.vmem [shape: bf16[2,32,96], index: 2, kind: input, shape index: {}]
  %s3 = inlined_call_operand.hbm [shape: f32[2,1,96], index: 3, kind: input, shape index: {}]
  %s4 = inlined_call_operand.vmem [shape: bf16[2,32,32], index: 4, kind: input, shape index: {}]
  %s5 = inlined_call_operand.vmem [shape: f32[2,1,32], index: 5, kind: input, shape index: {}]
  %s6 = inlined_call_operand.vmem [shape: f32[2,1,32], index: 6, kind: input, shape index: {}]
  %s7 = inlined_call_operand.hbm [shape: f32[2,1,32], index: 7, kind: input, shape index: {}]
  %s8 = inlined_call_operand.vmem [shape: bf16[2,32,64], index: 8, kind: input, shape index: {}]
  %s9 = inlined_call_operand.vmem [shape: f32[2,1,64], index: 9, kind: input, shape index: {}]
  %s10 = inlined_call_operand.vmem [shape: bf16[2,64,32], index: 10, kind: input, shape index: {}]
  %s11 = inlined_call_operand.vmem [shape: f32[2,1,32], index: 11, kind: input, shape index: {}]
  %s12 = inlined_call_operand.vmem [shape: f32[2,1,32], index: 12, kind: input, shape index: {}]
  %s13 = inlined_call_operand.hbm [shape: f32[2,1,32], index: 13, kind: input, shape index: {}]
  %s14 = inlined_call_operand.hbm [shape: bf16[16,32], index: 14, kind: output, shape index: {}]
  %s15 = sld [smem:[#allocation0]]
  $region117: #{tpu_custom_call.1} parent=0
    _
  %s17 = ssub.s32 1, %s15
  %s18 = scalar_select 0, %s17, %s15
  $region1: #{tpu_custom_call.1} parent=0
    #allocation3 [shape = 'u8[8192]{0}', space=vmem, size = 0x2000, scoped, tag = 'input window, operand 0, single buffered']
    #allocation4 [shape = 's32[2]{0}', space=sflag, size = 0x8, scoped, tag = 'scoped memory for tpu_custom_call.1']
    #allocation5 [shape = 's32[2]{0}', space=sflag, size = 0x8, scoped, tag = 'scoped memory for tpu_custom_call.1']
    #allocation6 [shape = 'u8[4096]{0}', space=vmem, size = 0x1000, scoped, tag = 'input window, operand 1, single buffered']
    #allocation7 [shape = 's32[1]{0}', space=sflag, size = 0x4, scoped, tag = 'scoped memory for tpu_custom_call.1']
    #allocation8 [shape = 'u8[1024]{0}', space=vmem, size = 0x400, scoped, tag = 'input window, operand 3']
    #allocation9 [shape = 'u8[1024]{0}', space=vmem, size = 0x400, scoped, tag = 'input window, operand 7']
    #allocation10 [shape = 'u8[1024]{0}', space=vmem, size = 0x400, scoped, tag = 'input window, operand 13']
    #allocation11 [shape = 'u8[4096]{0}', space=vmem, size = 0x1000, scoped, tag = 'output window, operand 0, single buffered']
    %19 = vsyncpa [#allocation4], 0
    %20 = vsyncpa [#allocation7], 0
    %21 = vsyncpa [#allocation5], 0
    loop: start=0, step=1, limit=4
    $region2: #{tpu_custom_call.1} parent=1 // loop_pre_header
      _
    $region3: #{tpu_custom_call.1} parent=1 // loop_header
      %s23 = sphi 0, %s27
      %p24 = scmp.ge.s32.totalorder %s23, 4
      %s31 = sphi 0, %s31
      %s33 = sphi 0, %s31
      %s34 = sphi 0, %s33
      %s48 = sphi 0, %s34
      %s52 = sphi 0, %s52
      %s54 = sphi 0, %s52
      %s55 = sphi 0, %s54
      %s69 = sphi 0, %s55
      %s75 = sphi 0, %s77
      %s78 = sphi 0, %s75
      %s79 = sphi 0, %s78
      %s95 = sphi 0, %s79
      %s101 = sphi 0, %s103
      %s104 = sphi 0, %s101
      %s105 = sphi 0, %s104
      %s121 = sphi 0, %s105
      %s127 = sphi 0, %s129
      %s130 = sphi 0, %s127
      %s131 = sphi 0, %s130
      %s147 = sphi 0, %s131
      %s153 = sphi 0, %s155
      %s156 = sphi 0, %s153
      %s157 = sphi 0, %s156
      %s173 = sphi 0, %s157
      %s179 = sphi 0, %s181
      %s182 = sphi 0, %s179
      %s183 = sphi 0, %s182
      %s199 = sphi 0, %s183
      %s205 = sphi 0, %s207
      %s208 = sphi 0, %s205
      %s209 = sphi 0, %s208
      %s225 = sphi 0, %s209
      %s231 = sphi 0, %s233
      %s234 = sphi 0, %s231
      %s235 = sphi 0, %s234
      %s251 = sphi 0, %s235
      %s257 = sphi 0, %s259
      %s260 = sphi 0, %s257
      %s261 = sphi 0, %s260
      %s277 = sphi 0, %s261
      %s283 = sphi 0, %s285
      %s286 = sphi 0, %s283
      %s287 = sphi 0, %s286
      %s303 = sphi 0, %s287
      %s309 = sphi 0, %s311
      %s312 = sphi 0, %s309
      %s313 = sphi 0, %s312
      %s329 = sphi 0, %s313
      %s335 = sphi 0, %s337
      %s338 = sphi 0, %s335
      %s339 = sphi 0, %s338
      %s355 = sphi 0, %s339
      %s361 = sphi 0, %s363
      %s364 = sphi 0, %s361
      %s365 = sphi 0, %s364
      %s381 = sphi 0, %s365
      %s385 = sphi 0, %s385
      %s387 = sphi 0, %s385
      %s388 = sphi 0, %s387
      %s402 = sphi 0, %s388
    $region4: #{tpu_custom_call.1} parent=1 // loop_header_branch
      %26 = sbr.rel (%p24) target = $region8
    $region5: #{tpu_custom_call.1} parent=1 // loop_body
      %s28 = ssub.s32 %s23, 1
      %s29 = ssub.s32 %s23, 2
      %s30 = sadd.s32 %s23, 1
      %s32 = sadd.s32 %s31, 1
      %p35 = scmp.eq.s32.totalorder %s23, 1
      %p36 = scmp.ne.s32.totalorder %s31, %s33
      %p37 = scmp.eq.s32.totalorder %s23, 0
      %p38 = por %p36, %p37
      %p39 = scmp.ne.s32.totalorder %s31, %s33
      %p40 = scmp.eq.s32.totalorder %s28, 1
      %p41 = por %p39, %p40
      %p42 = scmp.ne.s32.totalorder %s33, %s34
      %p43 = scmp.eq.s32.totalorder %s28, 0
      %p44 = por %p42, %p43
      %p45 = scmp.ne.s32.totalorder %s33, %s34
      %p46 = scmp.eq.s32.totalorder %s29, 1
      %p47 = por %p45, %p46
      %p49 = scmp.ne.s32.totalorder %s34, %s48
      %p50 = scmp.eq.s32.totalorder %s29, 0
      %p51 = por %p49, %p50
      %s53 = sadd.s32 %s52, 1
      %p56 = scmp.eq.s32.totalorder %s23, 1
      %p57 = scmp.ne.s32.totalorder %s52, %s54
      %p58 = scmp.eq.s32.totalorder %s23, 0
      %p59 = por %p57, %p58
      %p60 = scmp.ne.s32.totalorder %s52, %s54
      %p61 = scmp.eq.s32.totalorder %s28, 1
      %p62 = por %p60, %p61
      %p63 = scmp.ne.s32.totalorder %s54, %s55
      %p64 = scmp.eq.s32.totalorder %s28, 0
      %p65 = por %p63, %p64
      %p66 = scmp.ne.s32.totalorder %s54, %s55
      %p67 = scmp.eq.s32.totalorder %s29, 1
      %p68 = por %p66, %p67
      %p70 = scmp.ne.s32.totalorder %s55, %s69
      %p71 = scmp.eq.s32.totalorder %s29, 0
      %p72 = por %p70, %p71
      %s73 = ssub.s32 %s23, %s30
      %p74 = scmp.eq.s32.totalorder %s73, 0
      %s76 = sadd.s32 %s75, 1
      %s77 = scalar_select %p74, %s75, %s76
      %p80 = pneg %p74
      %p81 = scmp.eq.s32.totalorder %s23, 1
      %p82 = por %p80, %p81
      %p83 = scmp.ne.s32.totalorder %s75, %s78
      %p84 = scmp.eq.s32.totalorder %s23, 0
      %p85 = por %p83, %p84
      %p86 = scmp.ne.s32.totalorder %s75, %s78
      %p87 = scmp.eq.s32.totalorder %s28, 1
      %p88 = por %p86, %p87
      %p89 = scmp.ne.s32.totalorder %s78, %s79
      %p90 = scmp.eq.s32.totalorder %s28, 0
      %p91 = por %p89, %p90
      %p92 = scmp.ne.s32.totalorder %s78, %s79
      %p93 = scmp.eq.s32.totalorder %s29, 1
      %p94 = por %p92, %p93
      %p96 = scmp.ne.s32.totalorder %s79, %s95
      %p97 = scmp.eq.s32.totalorder %s29, 0
      %p98 = por %p96, %p97
      %s99 = ssub.s32 %s23, %s30
      %p100 = scmp.eq.s32.totalorder %s99, 0
      %s102 = sadd.s32 %s101, 1
      %s103 = scalar_select %p100, %s101, %s102
      %p106 = pneg %p100
      %p107 = scmp.eq.s32.totalorder %s23, 1
      %p108 = por %p106, %p107
      %p109 = scmp.ne.s32.totalorder %s101, %s104
      %p110 = scmp.eq.s32.totalorder %s23, 0
      %p111 = por %p109, %p110
      %p112 = scmp.ne.s32.totalorder %s101, %s104
      %p113 = scmp.eq.s32.totalorder %s28, 1
      %p114 = por %p112, %p113
      %p115 = scmp.ne.s32.totalorder %s104, %s105
      %p116 = scmp.eq.s32.totalorder %s28, 0
      %p117 = por %p115, %p116
      %p118 = scmp.ne.s32.totalorder %s104, %s105
      %p119 = scmp.eq.s32.totalorder %s29, 1
      %p120 = por %p118, %p119
      %p122 = scmp.ne.s32.totalorder %s105, %s121
      %p123 = scmp.eq.s32.totalorder %s29, 0
      %p124 = por %p122, %p123
      %s125 = ssub.s32 %s23, %s30
      %p126 = scmp.eq.s32.totalorder %s125, 0
      %s128 = sadd.s32 %s127, 1
      %s129 = scalar_select %p126, %s127, %s128
      %p132 = pneg %p126
      %p133 = scmp.eq.s32.totalorder %s23, 1
      %p134 = por %p132, %p133
      %p135 = scmp.ne.s32.totalorder %s127, %s130
      %p136 = scmp.eq.s32.totalorder %s23, 0
      %p137 = por %p135, %p136
      %p138 = scmp.ne.s32.totalorder %s127, %s130
      %p139 = scmp.eq.s32.totalorder %s28, 1
      %p140 = por %p138, %p139
      %p141 = scmp.ne.s32.totalorder %s130, %s131
      %p142 = scmp.eq.s32.totalorder %s28, 0
      %p143 = por %p141, %p142
      %p144 = scmp.ne.s32.totalorder %s130, %s131
      %p145 = scmp.eq.s32.totalorder %s29, 1
      %p146 = por %p144, %p145
      %p148 = scmp.ne.s32.totalorder %s131, %s147
      %p149 = scmp.eq.s32.totalorder %s29, 0
      %p150 = por %p148, %p149
      %s151 = ssub.s32 %s23, %s30
      %p152 = scmp.eq.s32.totalorder %s151, 0
      %s154 = sadd.s32 %s153, 1
      %s155 = scalar_select %p152, %s153, %s154
      %p158 = pneg %p152
      %p159 = scmp.eq.s32.totalorder %s23, 1
      %p160 = por %p158, %p159
      %p161 = scmp.ne.s32.totalorder %s153, %s156
      %p162 = scmp.eq.s32.totalorder %s23, 0
      %p163 = por %p161, %p162
      %p164 = scmp.ne.s32.totalorder %s153, %s156
      %p165 = scmp.eq.s32.totalorder %s28, 1
      %p166 = por %p164, %p165
      %p167 = scmp.ne.s32.totalorder %s156, %s157
      %p168 = scmp.eq.s32.totalorder %s28, 0
      %p169 = por %p167, %p168
      %p170 = scmp.ne.s32.totalorder %s156, %s157
      %p171 = scmp.eq.s32.totalorder %s29, 1
      %p172 = por %p170, %p171
      %p174 = scmp.ne.s32.totalorder %s157, %s173
      %p175 = scmp.eq.s32.totalorder %s29, 0
      %p176 = por %p174, %p175
      %s177 = ssub.s32 %s23, %s30
      %p178 = scmp.eq.s32.totalorder %s177, 0
      %s180 = sadd.s32 %s179, 1
      %s181 = scalar_select %p178, %s179, %s180
      %p184 = pneg %p178
      %p185 = scmp.eq.s32.totalorder %s23, 1
      %p186 = por %p184, %p185
      %p187 = scmp.ne.s32.totalorder %s179, %s182
      %p188 = scmp.eq.s32.totalorder %s23, 0
      %p189 = por %p187, %p188
      %p190 = scmp.ne.s32.totalorder %s179, %s182
      %p191 = scmp.eq.s32.totalorder %s28, 1
      %p192 = por %p190, %p191
      %p193 = scmp.ne.s32.totalorder %s182, %s183
      %p194 = scmp.eq.s32.totalorder %s28, 0
      %p195 = por %p193, %p194
      %p196 = scmp.ne.s32.totalorder %s182, %s183
      %p197 = scmp.eq.s32.totalorder %s29, 1
      %p198 = por %p196, %p197
      %p200 = scmp.ne.s32.totalorder %s183, %s199
      %p201 = scmp.eq.s32.totalorder %s29, 0
      %p202 = por %p200, %p201
      %s203 = ssub.s32 %s23, %s30
      %p204 = scmp.eq.s32.totalorder %s203, 0
      %s206 = sadd.s32 %s205, 1
      %s207 = scalar_select %p204, %s205, %s206
      %p210 = pneg %p204
      %p211 = scmp.eq.s32.totalorder %s23, 1
      %p212 = por %p210, %p211
      %p213 = scmp.ne.s32.totalorder %s205, %s208
      %p214 = scmp.eq.s32.totalorder %s23, 0
      %p215 = por %p213, %p214
      %p216 = scmp.ne.s32.totalorder %s205, %s208
      %p217 = scmp.eq.s32.totalorder %s28, 1
      %p218 = por %p216, %p217
      %p219 = scmp.ne.s32.totalorder %s208, %s209
      %p220 = scmp.eq.s32.totalorder %s28, 0
      %p221 = por %p219, %p220
      %p222 = scmp.ne.s32.totalorder %s208, %s209
      %p223 = scmp.eq.s32.totalorder %s29, 1
      %p224 = por %p222, %p223
      %p226 = scmp.ne.s32.totalorder %s209, %s225
      %p227 = scmp.eq.s32.totalorder %s29, 0
      %p228 = por %p226, %p227
      %s229 = ssub.s32 %s23, %s30
      %p230 = scmp.eq.s32.totalorder %s229, 0
      %s232 = sadd.s32 %s231, 1
      %s233 = scalar_select %p230, %s231, %s232
      %p236 = pneg %p230
      %p237 = scmp.eq.s32.totalorder %s23, 1
      %p238 = por %p236, %p237
      %p239 = scmp.ne.s32.totalorder %s231, %s234
      %p240 = scmp.eq.s32.totalorder %s23, 0
      %p241 = por %p239, %p240
      %p242 = scmp.ne.s32.totalorder %s231, %s234
      %p243 = scmp.eq.s32.totalorder %s28, 1
      %p244 = por %p242, %p243
      %p245 = scmp.ne.s32.totalorder %s234, %s235
      %p246 = scmp.eq.s32.totalorder %s28, 0
      %p247 = por %p245, %p246
      %p248 = scmp.ne.s32.totalorder %s234, %s235
      %p249 = scmp.eq.s32.totalorder %s29, 1
      %p250 = por %p248, %p249
      %p252 = scmp.ne.s32.totalorder %s235, %s251
      %p253 = scmp.eq.s32.totalorder %s29, 0
      %p254 = por %p252, %p253
      %s255 = ssub.s32 %s23, %s30
      %p256 = scmp.eq.s32.totalorder %s255, 0
      %s258 = sadd.s32 %s257, 1
      %s259 = scalar_select %p256, %s257, %s258
      %p262 = pneg %p256
      %p263 = scmp.eq.s32.totalorder %s23, 1
      %p264 = por %p262, %p263
      %p265 = scmp.ne.s32.totalorder %s257, %s260
      %p266 = scmp.eq.s32.totalorder %s23, 0
      %p267 = por %p265, %p266
      %p268 = scmp.ne.s32.totalorder %s257, %s260
      %p269 = scmp.eq.s32.totalorder %s28, 1
      %p270 = por %p268, %p269
      %p271 = scmp.ne.s32.totalorder %s260, %s261
      %p272 = scmp.eq.s32.totalorder %s28, 0
      %p273 = por %p271, %p272
      %p274 = scmp.ne.s32.totalorder %s260, %s261
      %p275 = scmp.eq.s32.totalorder %s29, 1
      %p276 = por %p274, %p275
      %p278 = scmp.ne.s32.totalorder %s261, %s277
      %p279 = scmp.eq.s32.totalorder %s29, 0
      %p280 = por %p278, %p279
      %s281 = ssub.s32 %s23, %s30
      %p282 = scmp.eq.s32.totalorder %s281, 0
      %s284 = sadd.s32 %s283, 1
      %s285 = scalar_select %p282, %s283, %s284
      %p288 = pneg %p282
      %p289 = scmp.eq.s32.totalorder %s23, 1
      %p290 = por %p288, %p289
      %p291 = scmp.ne.s32.totalorder %s283, %s286
      %p292 = scmp.eq.s32.totalorder %s23, 0
      %p293 = por %p291, %p292
      %p294 = scmp.ne.s32.totalorder %s283, %s286
      %p295 = scmp.eq.s32.totalorder %s28, 1
      %p296 = por %p294, %p295
      %p297 = scmp.ne.s32.totalorder %s286, %s287
      %p298 = scmp.eq.s32.totalorder %s28, 0
      %p299 = por %p297, %p298
      %p300 = scmp.ne.s32.totalorder %s286, %s287
      %p301 = scmp.eq.s32.totalorder %s29, 1
      %p302 = por %p300, %p301
      %p304 = scmp.ne.s32.totalorder %s287, %s303
      %p305 = scmp.eq.s32.totalorder %s29, 0
      %p306 = por %p304, %p305
      %s307 = ssub.s32 %s23, %s30
      %p308 = scmp.eq.s32.totalorder %s307, 0
      %s310 = sadd.s32 %s309, 1
      %s311 = scalar_select %p308, %s309, %s310
      %p314 = pneg %p308
      %p315 = scmp.eq.s32.totalorder %s23, 1
      %p316 = por %p314, %p315
      %p317 = scmp.ne.s32.totalorder %s309, %s312
      %p318 = scmp.eq.s32.totalorder %s23, 0
      %p319 = por %p317, %p318
      %p320 = scmp.ne.s32.totalorder %s309, %s312
      %p321 = scmp.eq.s32.totalorder %s28, 1
      %p322 = por %p320, %p321
      %p323 = scmp.ne.s32.totalorder %s312, %s313
      %p324 = scmp.eq.s32.totalorder %s28, 0
      %p325 = por %p323, %p324
      %p326 = scmp.ne.s32.totalorder %s312, %s313
      %p327 = scmp.eq.s32.totalorder %s29, 1
      %p328 = por %p326, %p327
      %p330 = scmp.ne.s32.totalorder %s313, %s329
      %p331 = scmp.eq.s32.totalorder %s29, 0
      %p332 = por %p330, %p331
      %s333 = ssub.s32 %s23, %s30
      %p334 = scmp.eq.s32.totalorder %s333, 0
      %s336 = sadd.s32 %s335, 1
      %s337 = scalar_select %p334, %s335, %s336
      %p340 = pneg %p334
      %p341 = scmp.eq.s32.totalorder %s23, 1
      %p342 = por %p340, %p341
      %p343 = scmp.ne.s32.totalorder %s335, %s338
      %p344 = scmp.eq.s32.totalorder %s23, 0
      %p345 = por %p343, %p344
      %p346 = scmp.ne.s32.totalorder %s335, %s338
      %p347 = scmp.eq.s32.totalorder %s28, 1
      %p348 = por %p346, %p347
      %p349 = scmp.ne.s32.totalorder %s338, %s339
      %p350 = scmp.eq.s32.totalorder %s28, 0
      %p351 = por %p349, %p350
      %p352 = scmp.ne.s32.totalorder %s338, %s339
      %p353 = scmp.eq.s32.totalorder %s29, 1
      %p354 = por %p352, %p353
      %p356 = scmp.ne.s32.totalorder %s339, %s355
      %p357 = scmp.eq.s32.totalorder %s29, 0
      %p358 = por %p356, %p357
      %s359 = ssub.s32 %s23, %s30
      %p360 = scmp.eq.s32.totalorder %s359, 0
      %s362 = sadd.s32 %s361, 1
      %s363 = scalar_select %p360, %s361, %s362
      %p366 = pneg %p360
      %p367 = scmp.eq.s32.totalorder %s23, 1
      %p368 = por %p366, %p367
      %p369 = scmp.ne.s32.totalorder %s361, %s364
      %p370 = scmp.eq.s32.totalorder %s23, 0
      %p371 = por %p369, %p370
      %p372 = scmp.ne.s32.totalorder %s361, %s364
      %p373 = scmp.eq.s32.totalorder %s28, 1
      %p374 = por %p372, %p373
      %p375 = scmp.ne.s32.totalorder %s364, %s365
      %p376 = scmp.eq.s32.totalorder %s28, 0
      %p377 = por %p375, %p376
      %p378 = scmp.ne.s32.totalorder %s364, %s365
      %p379 = scmp.eq.s32.totalorder %s29, 1
      %p380 = por %p378, %p379
      %p382 = scmp.ne.s32.totalorder %s365, %s381
      %p383 = scmp.eq.s32.totalorder %s29, 0
      %p384 = por %p382, %p383
      %s386 = sadd.s32 %s385, 1
      %p389 = scmp.eq.s32.totalorder %s23, 1
      %p390 = scmp.ne.s32.totalorder %s385, %s387
      %p391 = scmp.eq.s32.totalorder %s23, 0
      %p392 = por %p390, %p391
      %p393 = scmp.ne.s32.totalorder %s385, %s387
      %p394 = scmp.eq.s32.totalorder %s28, 1
      %p395 = por %p393, %p394
      %p396 = scmp.ne.s32.totalorder %s387, %s388
      %p397 = scmp.eq.s32.totalorder %s28, 0
      %p398 = por %p396, %p397
      %p399 = scmp.ne.s32.totalorder %s387, %s388
      %p400 = scmp.eq.s32.totalorder %s29, 1
      %p401 = por %p399, %p400
      %p403 = scmp.ne.s32.totalorder %s388, %s402
      %p404 = scmp.eq.s32.totalorder %s29, 0
      %p405 = por %p403, %p404
      %p406 = scmp.le.s32.totalorder 1, %s23
      %p407 = scmp.lt.s32.totalorder %s23, 3
      %p408 = pnand %p406, %p407
      %p409 = pneg %p408
      // Predicated region
      $region9: #{tpu_custom_call.1} parent=5 // pred_check
        _
      $region10: #{tpu_custom_call.1} parent=5 // pred_check_branch
        %411 = sbr.rel (%p408) target = $region12
      $region11: #{tpu_custom_call.1} parent=5 // pred_region
        %s412 = ssub.s32 %s23, 1
        // Predicated region
        $region13: #{tpu_custom_call.1} parent=11 // pred_check
          %p413 = pneg %p44
        $region14: #{tpu_custom_call.1} parent=11 // pred_check_branch
          %415 = sbr.rel (%p413) target = $region16
        $region15: #{tpu_custom_call.1} parent=11 // pred_region
          %417 = vsyncadd [#allocation4], 0
          %s418 = sshll.u32 %s0, 4
          %s419 = int_to_ptr.hbm [resolvable:$true] %s418
          %s420 = sshll.u32 [#allocation3], 4
          %s421 = int_to_ptr.vmem [resolvable:$true] %s420
          %426 = dma.hbm_to_vmem [thread:$0]  %s419, 256, %s421, [#allocation4], 128, 128, 8
        $region16: #{tpu_custom_call.1} parent=11 // pred_fallthru
          _
        // Predicated region
        $region17: #{tpu_custom_call.1} parent=11 // pred_check
          %p427 = pneg %p65
        $region18: #{tpu_custom_call.1} parent=11 // pred_check_branch
          %429 = sbr.rel (%p427) target = $region20
        $region19: #{tpu_custom_call.1} parent=11 // pred_region
          %431 = vsyncadd [#allocation7], 0
          %s432 = sshll.u32 %s1, 4
          %s433 = int_to_ptr.hbm [resolvable:$true] %s432
          %s434 = sshll.u32 [#allocation6], 4
          %s435 = int_to_ptr.vmem [resolvable:$true] %s434
          %440 = dma.hbm_to_vmem [thread:$0]  %s433, 128, %s435, [#allocation7], 16, 16, 1
        $region20: #{tpu_custom_call.1} parent=11 // pred_fallthru
          _
      $region12: #{tpu_custom_call.1} parent=5 // pred_fallthru
        _
      %p441 = scmp.lt.s32.totalorder %s23, 2
      // Predicated region
      $region21: #{tpu_custom_call.1} parent=5 // pred_check
        %p442 = pneg %p441
      $region22: #{tpu_custom_call.1} parent=5 // pred_check_branch
        %444 = sbr.rel (%p442) target = $region24
      $region23: #{tpu_custom_call.1} parent=5 // pred_region
        // Predicated region
        $region25: #{tpu_custom_call.1} parent=23 // pred_check
          %p445 = pneg %p85
        $region26: #{tpu_custom_call.1} parent=23 // pred_check_branch
          %447 = sbr.rel (%p445) target = $region28
        $region27: #{tpu_custom_call.1} parent=23 // pred_region
          %p448 = scmp.lt.s32.totalorder %s23, 1
          %s449 = scalar_select %p448, %s23, 1
          %s450 = smul.addr %s449, 4
          %s451 = smul.addr %s450, 4
          %s452 = scalar_lea.vmem %s2, %s451
        $region28: #{tpu_custom_call.1} parent=23 // pred_fallthru
          _
        // Predicated region
        $region29: #{tpu_custom_call.1} parent=23 // pred_check
          %p453 = pneg %p111
        $region30: #{tpu_custom_call.1} parent=23 // pred_check_branch
          %455 = sbr.rel (%p453) target = $region32
        $region31: #{tpu_custom_call.1} parent=23 // pred_region
          %s456 = sand.u32 %s23, 1
          %s457 = scalar_lea.sflag [#allocation4], %s456
          %s458 = sand.u32 %s101, 1
          %s459 = scalar_lea.vmem [#allocation8], %s458
          %461 = vsyncadd %s457, 0
          %s462 = scalar_lea.hbm %s3, %s23
          %s464 = sshll.u32 %s462, 4
          %s465 = int_to_ptr.hbm [resolvable:$true] %s464
          %s466 = sshll.u32 %s459, 4
          %s467 = int_to_ptr.vmem [resolvable:$true] %s466
          %469 = dma.hbm_to_vmem [thread:$0]  %s465, 16, %s467, %s457
        $region32: #{tpu_custom_call.1} parent=23 // pred_fallthru
          _
        // Predicated region
        $region33: #{tpu_custom_call.1} parent=23 // pred_check
          %p470 = pneg %p137
        $region34: #{tpu_custom_call.1} parent=23 // pred_check_branch
          %472 = sbr.rel (%p470) target = $region36
        $region35: #{tpu_custom_call.1} parent=23 // pred_region
          %p473 = scmp.lt.s32.totalorder %s23, 1
          %s474 = scalar_select %p473, %s23, 1
          %s475 = smul.addr %s474, 4
          %s476 = smul.addr %s475, 4
          %s477 = scalar_lea.vmem %s4, %s476
        $region36: #{tpu_custom_call.1} parent=23 // pred_fallthru
          _
        // Predicated region
        $region37: #{tpu_custom_call.1} parent=23 // pred_check
          %p478 = pneg %p163
        $region38: #{tpu_custom_call.1} parent=23 // pred_check_branch
          %480 = sbr.rel (%p478) target = $region40
        $region39: #{tpu_custom_call.1} parent=23 // pred_region
          %p481 = scmp.lt.s32.totalorder %s23, 1
          %s482 = scalar_select %p481, %s23, 1
          %s483 = scalar_lea.vmem %s5, %s482
        $region40: #{tpu_custom_call.1} parent=23 // pred_fallthru
          _
        // Predicated region
        $region41: #{tpu_custom_call.1} parent=23 // pred_check
          %p484 = pneg %p189
        $region42: #{tpu_custom_call.1} parent=23 // pred_check_branch
          %486 = sbr.rel (%p484) target = $region44
        $region43: #{tpu_custom_call.1} parent=23 // pred_region
          %p487 = scmp.lt.s32.totalorder %s23, 1
          %s488 = scalar_select %p487, %s23, 1
          %s489 = scalar_lea.vmem %s6, %s488
        $region44: #{tpu_custom_call.1} parent=23 // pred_fallthru
          _
        // Predicated region
        $region45: #{tpu_custom_call.1} parent=23 // pred_check
          %p490 = pneg %p215
        $region46: #{tpu_custom_call.1} parent=23 // pred_check_branch
          %492 = sbr.rel (%p490) target = $region48
        $region47: #{tpu_custom_call.1} parent=23 // pred_region
          %s493 = sand.u32 %s23, 1
          %s494 = scalar_lea.sflag [#allocation4], %s493
          %s495 = sand.u32 %s205, 1
          %s496 = scalar_lea.vmem [#allocation9], %s495
          %498 = vsyncadd %s494, 0
          %s499 = scalar_lea.hbm %s7, %s23
          %s501 = sshll.u32 %s499, 4
          %s502 = int_to_ptr.hbm [resolvable:$true] %s501
          %s503 = sshll.u32 %s496, 4
          %s504 = int_to_ptr.vmem [resolvable:$true] %s503
          %506 = dma.hbm_to_vmem [thread:$0]  %s502, 16, %s504, %s494
        $region48: #{tpu_custom_call.1} parent=23 // pred_fallthru
          _
        // Predicated region
        $region49: #{tpu_custom_call.1} parent=23 // pred_check
          %p507 = pneg %p241
        $region50: #{tpu_custom_call.1} parent=23 // pred_check_branch
          %509 = sbr.rel (%p507) target = $region52
        $region51: #{tpu_custom_call.1} parent=23 // pred_region
          %p510 = scmp.lt.s32.totalorder %s23, 1
          %s511 = scalar_select %p510, %s23, 1
          %s512 = smul.addr %s511, 4
          %s513 = smul.addr %s512, 4
          %s514 = scalar_lea.vmem %s8, %s513
        $region52: #{tpu_custom_call.1} parent=23 // pred_fallthru
          _
        // Predicated region
        $region53: #{tpu_custom_call.1} parent=23 // pred_check
          %p515 = pneg %p267
        $region54: #{tpu_custom_call.1} parent=23 // pred_check_branch
          %517 = sbr.rel (%p515) target = $region56
        $region55: #{tpu_custom_call.1} parent=23 // pred_region
          %p518 = scmp.lt.s32.totalorder %s23, 1
          %s519 = scalar_select %p518, %s23, 1
          %s520 = scalar_lea.vmem %s9, %s519
        $region56: #{tpu_custom_call.1} parent=23 // pred_fallthru
          _
        // Predicated region
        $region57: #{tpu_custom_call.1} parent=23 // pred_check
          %p521 = pneg %p293
        $region58: #{tpu_custom_call.1} parent=23 // pred_check_branch
          %523 = sbr.rel (%p521) target = $region60
        $region59: #{tpu_custom_call.1} parent=23 // pred_region
          %p524 = scmp.lt.s32.totalorder %s23, 1
          %s525 = scalar_select %p524, %s23, 1
          %s526 = smul.addr %s525, 8
          %s527 = smul.addr %s526, 4
          %s528 = scalar_lea.vmem %s10, %s527
        $region60: #{tpu_custom_call.1} parent=23 // pred_fallthru
          _
        // Predicated region
        $region61: #{tpu_custom_call.1} parent=23 // pred_check
          %p529 = pneg %p319
        $region62: #{tpu_custom_call.1} parent=23 // pred_check_branch
          %531 = sbr.rel (%p529) target = $region64
        $region63: #{tpu_custom_call.1} parent=23 // pred_region
          %p532 = scmp.lt.s32.totalorder %s23, 1
          %s533 = scalar_select %p532, %s23, 1
          %s534 = scalar_lea.vmem %s11, %s533
        $region64: #{tpu_custom_call.1} parent=23 // pred_fallthru
          _
        // Predicated region
        $region65: #{tpu_custom_call.1} parent=23 // pred_check
          %p535 = pneg %p345
        $region66: #{tpu_custom_call.1} parent=23 // pred_check_branch
          %537 = sbr.rel (%p535) target = $region68
        $region67: #{tpu_custom_call.1} parent=23 // pred_region
          %p538 = scmp.lt.s32.totalorder %s23, 1
          %s539 = scalar_select %p538, %s23, 1
          %s540 = scalar_lea.vmem %s12, %s539
        $region68: #{tpu_custom_call.1} parent=23 // pred_fallthru
          _
        // Predicated region
        $region69: #{tpu_custom_call.1} parent=23 // pred_check
          %p541 = pneg %p371
        $region70: #{tpu_custom_call.1} parent=23 // pred_check_branch
          %543 = sbr.rel (%p541) target = $region72
        $region71: #{tpu_custom_call.1} parent=23 // pred_region
          %s544 = sand.u32 %s23, 1
          %s545 = scalar_lea.sflag [#allocation4], %s544
          %s546 = sand.u32 %s361, 1
          %s547 = scalar_lea.vmem [#allocation10], %s546
          %549 = vsyncadd %s545, 0
          %s550 = scalar_lea.hbm %s13, %s23
          %s552 = sshll.u32 %s550, 4
          %s553 = int_to_ptr.hbm [resolvable:$true] %s552
          %s554 = sshll.u32 %s547, 4
          %s555 = int_to_ptr.vmem [resolvable:$true] %s554
          %557 = dma.hbm_to_vmem [thread:$0]  %s553, 16, %s555, %s545
        $region72: #{tpu_custom_call.1} parent=23 // pred_fallthru
          _
      $region24: #{tpu_custom_call.1} parent=5 // pred_fallthru
        _
      %p558 = scmp.le.s32.totalorder 1, %s23
      %p559 = scmp.lt.s32.totalorder %s23, 3
      %p560 = pnand %p558, %p559
      %p561 = pneg %p560
      // Predicated region
      $region73: #{tpu_custom_call.1} parent=5 // pred_check
        _
      $region74: #{tpu_custom_call.1} parent=5 // pred_check_branch
        %563 = sbr.rel (%p560) target = $region76
      $region75: #{tpu_custom_call.1} parent=5 // pred_region
        %s564 = ssub.s32 %s23, 1
        // Predicated region
        $region77: #{tpu_custom_call.1} parent=75 // pred_check
          %p565 = pneg %p44
        $region78: #{tpu_custom_call.1} parent=75 // pred_check_branch
          %567 = sbr.rel (%p565) target = $region80
        $region79: #{tpu_custom_call.1} parent=75 // pred_region
          %569 = dma.done [#allocation4], 256
        $region80: #{tpu_custom_call.1} parent=75 // pred_fallthru
          _
        // Predicated region
        $region81: #{tpu_custom_call.1} parent=75 // pred_check
          %p570 = pneg %p65
        $region82: #{tpu_custom_call.1} parent=75 // pred_check_branch
          %572 = sbr.rel (%p570) target = $region84
        $region83: #{tpu_custom_call.1} parent=75 // pred_region
          %574 = dma.done [#allocation7], 128
        $region84: #{tpu_custom_call.1} parent=75 // pred_fallthru
          _
        %s575 = sand.u32 %s28, 1
        %s576 = scalar_lea.sflag [#allocation4], %s575
        %s577 = sand.u32 %s104, 1
        %s578 = scalar_lea.vmem [#allocation8], %s577
        // Predicated region
        $region85: #{tpu_custom_call.1} parent=75 // pred_check
          %p579 = pneg %p117
        $region86: #{tpu_custom_call.1} parent=75 // pred_check_branch
          %581 = sbr.rel (%p579) target = $region88
        $region87: #{tpu_custom_call.1} parent=75 // pred_region
          %583 = dma.done %s576, 16
        $region88: #{tpu_custom_call.1} parent=75 // pred_fallthru
          _
        %s584 = sand.u32 %s28, 1
        %s585 = scalar_lea.sflag [#allocation4], %s584
        %s586 = sand.u32 %s208, 1
        %s587 = scalar_lea.vmem [#allocation9], %s586
        // Predicated region
        $region89: #{tpu_custom_call.1} parent=75 // pred_check
          %p588 = pneg %p221
        $region90: #{tpu_custom_call.1} parent=75 // pred_check_branch
          %590 = sbr.rel (%p588) target = $region92
        $region91: #{tpu_custom_call.1} parent=75 // pred_region
          %592 = dma.done %s585, 16
        $region92: #{tpu_custom_call.1} parent=75 // pred_fallthru
          _
        %s593 = sand.u32 %s28, 1
        %s594 = scalar_lea.sflag [#allocation4], %s593
        %s595 = sand.u32 %s364, 1
        %s596 = scalar_lea.vmem [#allocation10], %s595
        // Predicated region
        $region93: #{tpu_custom_call.1} parent=75 // pred_check
          %p597 = pneg %p377
        $region94: #{tpu_custom_call.1} parent=75 // pred_check_branch
          %599 = sbr.rel (%p597) target = $region96
        $region95: #{tpu_custom_call.1} parent=75 // pred_region
          %601 = dma.done %s594, 16
        $region96: #{tpu_custom_call.1} parent=75 // pred_fallthru
          _
        %p602 = pneg %p44
        %p603 = pneg %p41
        %p604 = pneg %p65
        %p605 = pneg %p62
        %p606 = scmp.lt.s32.totalorder %s28, 1
        %s607 = scalar_select %p606, %s28, 1
        %s608 = smul.addr %s607, 4
        %s609 = smul.addr %s608, 4
        %s610 = scalar_lea.vmem %s2, %s609
        %p611 = pneg %p91
        %p612 = pneg %p88
        %s613 = sand.u32 %s28, 1
        %s614 = scalar_lea.sflag [#allocation4], %s613
        %s615 = sand.u32 %s104, 1
        %s616 = scalar_lea.vmem [#allocation8], %s615
        %p617 = pneg %p117
        %p618 = pneg %p114
        %p619 = scmp.lt.s32.totalorder %s28, 1
        %s620 = scalar_select %p619, %s28, 1
        %s621 = smul.addr %s620, 4
        %s622 = smul.addr %s621, 4
        %s623 = scalar_lea.vmem %s4, %s622
        %p624 = pneg %p143
        %p625 = pneg %p140
        %p626 = scmp.lt.s32.totalorder %s28, 1
        %s627 = scalar_select %p626, %s28, 1
        %s628 = scalar_lea.vmem %s5, %s627
        %p629 = pneg %p169
        %p630 = pneg %p166
        %p631 = scmp.lt.s32.totalorder %s28, 1
        %s632 = scalar_select %p631, %s28, 1
        %s633 = scalar_lea.vmem %s6, %s632
        %p634 = pneg %p195
        %p635 = pneg %p192
        %s636 = sand.u32 %s28, 1
        %s637 = scalar_lea.sflag [#allocation4], %s636
        %s638 = sand.u32 %s208, 1
        %s639 = scalar_lea.vmem [#allocation9], %s638
        %p640 = pneg %p221
        %p641 = pneg %p218
        %p642 = scmp.lt.s32.totalorder %s28, 1
        %s643 = scalar_select %p642, %s28, 1
        %s644 = smul.addr %s643, 4
        %s645 = smul.addr %s644, 4
        %s646 = scalar_lea.vmem %s8, %s645
        %p647 = pneg %p247
        %p648 = pneg %p244
        %p649 = scmp.lt.s32.totalorder %s28, 1
        %s650 = scalar_select %p649, %s28, 1
        %s651 = scalar_lea.vmem %s9, %s650
        %p652 = pneg %p273
        %p653 = pneg %p270
        %p654 = scmp.lt.s32.totalorder %s28, 1
        %s655 = scalar_select %p654, %s28, 1
        %s656 = smul.addr %s655, 8
        %s657 = smul.addr %s656, 4
        %s658 = scalar_lea.vmem %s10, %s657
        %p659 = pneg %p299
        %p660 = pneg %p296
        %p661 = scmp.lt.s32.totalorder %s28, 1
        %s662 = scalar_select %p661, %s28, 1
        %s663 = scalar_lea.vmem %s11, %s662
        %p664 = pneg %p325
        %p665 = pneg %p322
        %p666 = scmp.lt.s32.totalorder %s28, 1
        %s667 = scalar_select %p666, %s28, 1
        %s668 = scalar_lea.vmem %s12, %s667
        %p669 = pneg %p351
        %p670 = pneg %p348
        %s671 = sand.u32 %s28, 1
        %s672 = scalar_lea.sflag [#allocation4], %s671
        %s673 = sand.u32 %s364, 1
        %s674 = scalar_lea.vmem [#allocation10], %s673
        %p675 = pneg %p377
        %p676 = pneg %p374
        %p677 = pneg %p398
        %p678 = pneg %p395
        %p679 = scmp.lt.s32.totalorder %s28, 1
        %s680 = scalar_select %p679, %s28, 1
        %s681 = smul.addr %s680, 4
        %s682 = smul.addr %s681, 4
        %s683 = scalar_lea.vmem %s2, %s682
        %p684 = scmp.lt.s32.totalorder %s28, 1
        %s685 = scalar_select %p684, %s28, 1
        %s686 = smul.addr %s685, 4
        %s687 = smul.addr %s686, 4
        %s688 = scalar_lea.vmem %s4, %s687
        %p689 = scmp.lt.s32.totalorder %s28, 1
        %s690 = scalar_select %p689, %s28, 1
        %s691 = scalar_lea.vmem %s5, %s690
        %p692 = scmp.lt.s32.totalorder %s28, 1
        %s693 = scalar_select %p692, %s28, 1
        %s694 = scalar_lea.vmem %s6, %s693
        %p695 = scmp.lt.s32.totalorder %s28, 1
        %s696 = scalar_select %p695, %s28, 1
        %s697 = smul.addr %s696, 4
        %s698 = smul.addr %s697, 4
        %s699 = scalar_lea.vmem %s8, %s698
        %p700 = scmp.lt.s32.totalorder %s28, 1
        %s701 = scalar_select %p700, %s28, 1
        %s702 = scalar_lea.vmem %s9, %s701
        %p703 = scmp.lt.s32.totalorder %s28, 1
        %s704 = scalar_select %p703, %s28, 1
        %s705 = smul.addr %s704, 8
        %s706 = smul.addr %s705, 4
        %s707 = scalar_lea.vmem %s10, %s706
        %p708 = scmp.lt.s32.totalorder %s28, 1
        %s709 = scalar_select %p708, %s28, 1
        %s710 = scalar_lea.vmem %s11, %s709
        %p711 = scmp.lt.s32.totalorder %s28, 1
        %s712 = scalar_select %p711, %s28, 1
        %s713 = scalar_lea.vmem %s12, %s712
        %p715 = scmp.eq.s32.totalorder %s28, 0
        // Predicated region
        $region97: #{tpu_custom_call.1} parent=75 // pred_check
          %p716 = pneg %p715
        $region98: #{tpu_custom_call.1} parent=75 // pred_check_branch
          %718 = sbr.rel (%p716) target = $region100
        $region99: #{tpu_custom_call.1} parent=75 // pred_region
          %v719 = vld [vmem:[#allocation3] sm:$0xff]
          %v720 = vld [vmem:[#allocation3 + $0x8] sm:$0xff]
          %vm721 = vcmask 261120
          %722 = vst.msk [vmem:[#allocation2] sm:$0xff] %vm721, %v719
          %723 = vst.msk [vmem:[#allocation2 + $0x8] sm:$0xff] %vm721, %v720
        $region100: #{tpu_custom_call.1} parent=75 // pred_fallthru
          _
        %v724 = vld [vmem:[#allocation2] sm:$0xff]
        %v725 = vld [vmem:[#allocation2 + $0x8] sm:$0xff]
        %v726 = vld [vmem:[#allocation6] sm:$0x1]
        %v727 = vld [vmem:[#allocation6 + $0x1] sm:$0x1]
        %v728 = vld [vmem:[#allocation6 + $0x2] sm:$0x1]
        %v729 = vld [vmem:[#allocation6 + $0x3] sm:$0x1]
        %v730 = vld [vmem:[#allocation6 + $0x4] sm:$0x1]
        %v731 = vld [vmem:[#allocation6 + $0x5] sm:$0x1]
        %v732 = vld [vmem:[#allocation6 + $0x6] sm:$0x1]
        %v733 = vld [vmem:[#allocation6 + $0x7] sm:$0x1]
        %v734 = vpack.c.bf16 %v725, %v724
        %v735 = vld [vmem:[%s683] sm:$0xf]
        %v736 = vld [vmem:[%s683 + $0x4] sm:$0xf]
        %v737 = vld [vmem:[%s683 + $0x8] sm:$0xf]
        %v738 = vld [vmem:[%s683 + $0xc] sm:$0xf]
        %v739 = vld [vmem:[%s578] sm:$0x1]
        %v741 = vperm.slane %v739, 0
        %v747 = vunpack.c.l.b16 %v735
        %v748 = vunpack.c.l.b16 %v736
        %v749 = vunpack.c.l.b16 %v737
        %v750 = vunpack.c.l.b16 %v738
        %v751 = vpack.c.b16 %v748, %v747
        %v752 = vpack.c.b16 %v750, %v749
        %vm755 = vcmask 261120
        %v757 = vsel %vm755, %v734, 0
        %759 = vmatpush.bf16.msra.mxu0 0
        %760 = vmatpush.bf16.msra.mxu0 0
        %761 = vmatpush.bf16.msra.mxu0 0
        %762 = vmatpush.bf16.msra.mxu0 0
        %763 = vmatpush.bf16.msra.mxu0 0
        %764 = vmatpush.bf16.msra.mxu0 0
        %765 = vmatpush.bf16.msra.mxu0 %v752
        %766 = vmatpush.bf16.msra.mxu0 %v751
        %767 = vmatmul.bf16.gmra.mxu0 %v757
        %v768 = vpop.f32.mrf.mxu0
        %v769 = vadd.f32 %v741, %v768
        %v770 = vpop.f32.mrf.mxu0
        %v771 = vadd.f32 %v741, %v770
        %772 = vdwg.mxu0
        %v773 = vpack.c.bf16 %v769, %v769
        %v774 = vpack.c.bf16 %v771, %v771
        %776 = vrot.lane.b32.xlu0 %v773, 120
        %v777 = vpop.permute.xlu0 %776
        %778 = vrot.lane.b32.xlu0 %v773, 112
        %v779 = vpop.permute.xlu0 %778
        %780 = vrot.lane.b32.xlu0 %v773, 104
        %v781 = vpop.permute.xlu0 %780
        %783 = vrot.lane.b32.xlu0 %v774, 120
        %v784 = vpop.permute.xlu0 %783
        %785 = vrot.lane.b32.xlu0 %v774, 112
        %v786 = vpop.permute.xlu0 %785
        %787 = vrot.lane.b32.xlu0 %v774, 104
        %v788 = vpop.permute.xlu0 %787
        %v797 = vperm.slane %v726, 0
        %v798 = vperm.slane %v727, 0
        %v799 = vperm.slane %v728, 0
        %v800 = vperm.slane %v729, 0
        %v801 = vperm.slane %v730, 0
        %v802 = vperm.slane %v731, 0
        %v803 = vperm.slane %v732, 0
        %v804 = vperm.slane %v733, 0
        %v813 = vunpack.c.l.b16 %v773
        %v814 = vpack.c.b16 %v813, %v813
        %815 = vrot.lane.b32.xlu0 %v814, 96
        %v816 = vpop.permute.xlu0 %815
        %vm817 = vcmask 64512
        %v819 = vsel %vm817, %v773, 0
        %v822 = vsel %vm817, %v816, 0
        %824 = vmatpush.bf16.xpose.msra.mxu0 0
        %825 = vmatpush.bf16.xpose.msra.mxu0 0
        %826 = vmatpush.bf16.xpose.msra.mxu0 0
        %827 = vmatpush.bf16.xpose.msra.mxu0 0
        %828 = vmatpush.bf16.xpose.msra.mxu0 0
        %829 = vmatpush.bf16.xpose.msra.mxu0 0
        %830 = vmatpush.bf16.xpose.msra.mxu0 0
        %831 = vmatpush.bf16.xpose.msra.mxu0 %v822
        %832 = vmatmul.bf16.gmra.mxu0 %v819
        %v833 = vpop.f32.mrf.mxu0
        %v834 = vadd.f32 %v797, %v833
        %v835 = vpop.f32.mrf.mxu0
        %836 = vdwg.mxu0
        %v837 = vunpack.c.l.b16 %v777
        %v838 = vpack.c.b16 %v837, %v837
        %839 = vrot.lane.b32.xlu0 %v838, 96
        %v840 = vpop.permute.xlu0 %839
        %v842 = vsel %vm817, %v777, 0
        %v845 = vsel %vm817, %v840, 0
        %847 = vmatpush.bf16.xpose.msra.mxu0 0
        %848 = vmatpush.bf16.xpose.msra.mxu0 0
        %849 = vmatpush.bf16.xpose.msra.mxu0 0
        %850 = vmatpush.bf16.xpose.msra.mxu0 0
        %851 = vmatpush.bf16.xpose.msra.mxu0 0
        %852 = vmatpush.bf16.xpose.msra.mxu0 0
        %853 = vmatpush.bf16.xpose.msra.mxu0 0
        %854 = vmatpush.bf16.xpose.msra.mxu0 %v845
        %855 = vmatmul.bf16.gmra.mxu0 %v842
        %v856 = vpop.f32.mrf.mxu0
        %v857 = vadd.f32 %v798, %v856
        %v858 = vpop.f32.mrf.mxu0
        %859 = vdwg.mxu0
        %v860 = vunpack.c.l.b16 %v779
        %v861 = vpack.c.b16 %v860, %v860
        %862 = vrot.lane.b32.xlu0 %v861, 96
        %v863 = vpop.permute.xlu0 %862
        %v865 = vsel %vm817, %v779, 0
        %v868 = vsel %vm817, %v863, 0
        %870 = vmatpush.bf16.xpose.msra.mxu0 0
        %871 = vmatpush.bf16.xpose.msra.mxu0 0
        %872 = vmatpush.bf16.xpose.msra.mxu0 0
        %873 = vmatpush.bf16.xpose.msra.mxu0 0
        %874 = vmatpush.bf16.xpose.msra.mxu0 0
        %875 = vmatpush.bf16.xpose.msra.mxu0 0
        %876 = vmatpush.bf16.xpose.msra.mxu0 0
        %877 = vmatpush.bf16.xpose.msra.mxu0 %v868
        %878 = vmatmul.bf16.gmra.mxu0 %v865
        %v879 = vpop.f32.mrf.mxu0
        %v880 = vadd.f32 %v799, %v879
        %v881 = vpop.f32.mrf.mxu0
        %882 = vdwg.mxu0
        %v883 = vunpack.c.l.b16 %v781
        %v884 = vpack.c.b16 %v883, %v883
        %885 = vrot.lane.b32.xlu0 %v884, 96
        %v886 = vpop.permute.xlu0 %885
        %v888 = vsel %vm817, %v781, 0
        %v891 = vsel %vm817, %v886, 0
        %893 = vmatpush.bf16.xpose.msra.mxu0 0
        %894 = vmatpush.bf16.xpose.msra.mxu0 0
        %895 = vmatpush.bf16.xpose.msra.mxu0 0
        %896 = vmatpush.bf16.xpose.msra.mxu0 0
        %897 = vmatpush.bf16.xpose.msra.mxu0 0
        %898 = vmatpush.bf16.xpose.msra.mxu0 0
        %899 = vmatpush.bf16.xpose.msra.mxu0 0
        %900 = vmatpush.bf16.xpose.msra.mxu0 %v891
        %901 = vmatmul.bf16.gmra.mxu0 %v888
        %v902 = vpop.f32.mrf.mxu0
        %v903 = vadd.f32 %v800, %v902
        %v904 = vpop.f32.mrf.mxu0
        %905 = vdwg.mxu0
        %v906 = vunpack.c.l.b16 %v774
        %v907 = vpack.c.b16 %v906, %v906
        %908 = vrot.lane.b32.xlu0 %v907, 96
        %v909 = vpop.permute.xlu0 %908
        %v911 = vsel %vm817, %v774, 0
        %v914 = vsel %vm817, %v909, 0
        %916 = vmatpush.bf16.xpose.msra.mxu0 0
        %917 = vmatpush.bf16.xpose.msra.mxu0 0
        %918 = vmatpush.bf16.xpose.msra.mxu0 0
        %919 = vmatpush.bf16.xpose.msra.mxu0 0
        %920 = vmatpush.bf16.xpose.msra.mxu0 0
        %921 = vmatpush.bf16.xpose.msra.mxu0 0
        %922 = vmatpush.bf16.xpose.msra.mxu0 0
        %923 = vmatpush.bf16.xpose.msra.mxu0 %v914
        %924 = vmatmul.bf16.gmra.mxu0 %v911
        %v925 = vpop.f32.mrf.mxu0
        %v926 = vadd.f32 %v801, %v925
        %v927 = vpop.f32.mrf.mxu0
        %928 = vdwg.mxu0
        %v929 = vunpack.c.l.b16 %v784
        %v930 = vpack.c.b16 %v929, %v929
        %931 = vrot.lane.b32.xlu0 %v930, 96
        %v932 = vpop.permute.xlu0 %931
        %v934 = vsel %vm817, %v784, 0
        %v937 = vsel %vm817, %v932, 0
        %939 = vmatpush.bf16.xpose.msra.mxu0 0
        %940 = vmatpush.bf16.xpose.msra.mxu0 0
        %941 = vmatpush.bf16.xpose.msra.mxu0 0
        %942 = vmatpush.bf16.xpose.msra.mxu0 0
        %943 = vmatpush.bf16.xpose.msra.mxu0 0
        %944 = vmatpush.bf16.xpose.msra.mxu0 0
        %945 = vmatpush.bf16.xpose.msra.mxu0 0
        %946 = vmatpush.bf16.xpose.msra.mxu0 %v937
        %947 = vmatmul.bf16.gmra.mxu0 %v934
        %v948 = vpop.f32.mrf.mxu0
        %v949 = vadd.f32 %v802, %v948
        %v950 = vpop.f32.mrf.mxu0
        %951 = vdwg.mxu0
        %v952 = vunpack.c.l.b16 %v786
        %v953 = vpack.c.b16 %v952, %v952
        %954 = vrot.lane.b32.xlu0 %v953, 96
        %v955 = vpop.permute.xlu0 %954
        %v957 = vsel %vm817, %v786, 0
        %v960 = vsel %vm817, %v955, 0
        %962 = vmatpush.bf16.xpose.msra.mxu0 0
        %963 = vmatpush.bf16.xpose.msra.mxu0 0
        %964 = vmatpush.bf16.xpose.msra.mxu0 0
        %965 = vmatpush.bf16.xpose.msra.mxu0 0
        %966 = vmatpush.bf16.xpose.msra.mxu0 0
        %967 = vmatpush.bf16.xpose.msra.mxu0 0
        %968 = vmatpush.bf16.xpose.msra.mxu0 0
        %969 = vmatpush.bf16.xpose.msra.mxu0 %v960
        %970 = vmatmul.bf16.gmra.mxu0 %v957
        %v971 = vpop.f32.mrf.mxu0
        %v972 = vadd.f32 %v803, %v971
        %v973 = vpop.f32.mrf.mxu0
        %974 = vdwg.mxu0
        %v975 = vunpack.c.l.b16 %v788
        %v976 = vpack.c.b16 %v975, %v975
        %977 = vrot.lane.b32.xlu0 %v976, 96
        %v978 = vpop.permute.xlu0 %977
        %v980 = vsel %vm817, %v788, 0
        %v983 = vsel %vm817, %v978, 0
        %985 = vmatpush.bf16.xpose.msra.mxu0 0
        %986 = vmatpush.bf16.xpose.msra.mxu0 0
        %987 = vmatpush.bf16.xpose.msra.mxu0 0
        %988 = vmatpush.bf16.xpose.msra.mxu0 0
        %989 = vmatpush.bf16.xpose.msra.mxu0 0
        %990 = vmatpush.bf16.xpose.msra.mxu0 0
        %991 = vmatpush.bf16.xpose.msra.mxu0 0
        %992 = vmatpush.bf16.xpose.msra.mxu0 %v983
        %993 = vmatmul.bf16.gmra.mxu0 %v980
        %v994 = vpop.f32.mrf.mxu0
        %v995 = vadd.f32 %v804, %v994
        %v996 = vpop.f32.mrf.mxu0
        %997 = vdwg.mxu0
        %v998 = vsel %vm817, %v834, -inf
        %999 = vmax.xlane.f32.xlu0 %v998
        %v1000 = vpop.xlane.xlu0 %999
        %v1001 = vsel %vm817, %v857, -inf
        %1002 = vmax.xlane.f32.xlu0 %v1001
        %v1003 = vpop.xlane.xlu0 %1002
        %v1004 = vsel %vm817, %v880, -inf
        %1005 = vmax.xlane.f32.xlu0 %v1004
        %v1006 = vpop.xlane.xlu0 %1005
        %v1007 = vsel %vm817, %v903, -inf
        %1008 = vmax.xlane.f32.xlu0 %v1007
        %v1009 = vpop.xlane.xlu0 %1008
        %v1010 = vsel %vm817, %v926, -inf
        %1011 = vmax.xlane.f32.xlu0 %v1010
        %v1012 = vpop.xlane.xlu0 %1011
        %v1013 = vsel %vm817, %v949, -inf
        %1014 = vmax.xlane.f32.xlu0 %v1013
        %v1015 = vpop.xlane.xlu0 %1014
        %v1016 = vsel %vm817, %v972, -inf
        %1017 = vmax.xlane.f32.xlu0 %v1016
        %v1018 = vpop.xlane.xlu0 %1017
        %v1019 = vsel %vm817, %v995, -inf
        %1020 = vmax.xlane.f32.xlu0 %v1019
        %v1021 = vpop.xlane.xlu0 %1020
        %v1022 = vsub.f32 %v834, %v1000
        %v1023 = vsub.f32 %v857, %v1003
        %v1024 = vsub.f32 %v880, %v1006
        %v1025 = vsub.f32 %v903, %v1009
        %v1026 = vsub.f32 %v926, %v1012
        %v1027 = vsub.f32 %v949, %v1015
        %v1028 = vsub.f32 %v972, %v1018
        %v1029 = vsub.f32 %v995, %v1021
        %v1030 = vmul.f32 %v1022, 1.442695
        %v1031 = vpow.pop %v1030
        %v1032 = vmul.f32 %v1023, 1.442695
        %v1033 = vpow.pop %v1032
        %v1034 = vmul.f32 %v1024, 1.442695
        %v1035 = vpow.pop %v1034
        %v1036 = vmul.f32 %v1025, 1.442695
        %v1037 = vpow.pop %v1036
        %v1038 = vmul.f32 %v1026, 1.442695
        %v1039 = vpow.pop %v1038
        %v1040 = vmul.f32 %v1027, 1.442695
        %v1041 = vpow.pop %v1040
        %v1042 = vmul.f32 %v1028, 1.442695
        %v1043 = vpow.pop %v1042
        %v1044 = vmul.f32 %v1029, 1.442695
        %v1045 = vpow.pop %v1044
        %v1046 = vsel %vm817, %v1031, 0.0
        %1047 = vadd.xlane.f32.xlu0 %v1046
        %v1048 = vpop.xlane.xlu0 %1047
        %v1049 = vsel %vm817, %v1033, 0.0
        %1050 = vadd.xlane.f32.xlu0 %v1049
        %v1051 = vpop.xlane.xlu0 %1050
        %v1052 = vsel %vm817, %v1035, 0.0
        %1053 = vadd.xlane.f32.xlu0 %v1052
        %v1054 = vpop.xlane.xlu0 %1053
        %v1055 = vsel %vm817, %v1037, 0.0
        %1056 = vadd.xlane.f32.xlu0 %v1055
        %v1057 = vpop.xlane.xlu0 %1056
        %v1058 = vsel %vm817, %v1039, 0.0
        %1059 = vadd.xlane.f32.xlu0 %v1058
        %v1060 = vpop.xlane.xlu0 %1059
        %v1061 = vsel %vm817, %v1041, 0.0
        %1062 = vadd.xlane.f32.xlu0 %v1061
        %v1063 = vpop.xlane.xlu0 %1062
        %v1064 = vsel %vm817, %v1043, 0.0
        %1065 = vadd.xlane.f32.xlu0 %v1064
        %v1066 = vpop.xlane.xlu0 %1065
        %v1067 = vsel %vm817, %v1045, 0.0
        %1068 = vadd.xlane.f32.xlu0 %v1067
        %v1069 = vpop.xlane.xlu0 %1068
        %v1070 = vpack.c.bf16 %v1031, %v1031
        %v1071 = vpack.c.bf16 %v1033, %v1033
        %v1072 = vpack.c.bf16 %v1035, %v1035
        %v1073 = vpack.c.bf16 %v1037, %v1037
        %v1074 = vpack.c.bf16 %v1039, %v1039
        %v1075 = vpack.c.bf16 %v1041, %v1041
        %v1076 = vpack.c.bf16 %v1043, %v1043
        %v1077 = vpack.c.bf16 %v1045, %v1045
        %1078 = vrot.lane.b32.xlu0 %v814, 64
        %v1079 = vpop.permute.xlu0 %1078
        %v1081 = vsel %vm817, %v1070, 0
        %vm1083 = vcmask 1043456
        %v1085 = vsel %vm1083, %v1079, 0
        %1087 = vmatpush.bf16.msra.mxu0 0
        %1088 = vmatpush.bf16.msra.mxu0 0
        %1089 = vmatpush.bf16.msra.mxu0 0
        %1090 = vmatpush.bf16.msra.mxu0 0
        %1091 = vmatpush.bf16.msra.mxu0 0
        %1092 = vmatpush.bf16.msra.mxu0 0
        %1093 = vmatpush.bf16.msra.mxu0 0
        %1094 = vmatpush.bf16.msra.mxu0 %v1085
        %1095 = vmatmul.bf16.gmra.mxu0 %v1081
        %v1096 = vpop.f32.mrf.mxu0
        %v1097 = vadd.f32 0.0, %v1096
        %v1098 = vpop.f32.mrf.mxu0
        %1099 = vdwg.mxu0
        %1100 = vrot.lane.b32.xlu0 %v838, 64
        %v1101 = vpop.permute.xlu0 %1100
        %v1103 = vsel %vm817, %v1071, 0
        %v1106 = vsel %vm1083, %v1101, 0
        %1108 = vmatpush.bf16.msra.mxu0 0
        %1109 = vmatpush.bf16.msra.mxu0 0
        %1110 = vmatpush.bf16.msra.mxu0 0
        %1111 = vmatpush.bf16.msra.mxu0 0
        %1112 = vmatpush.bf16.msra.mxu0 0
        %1113 = vmatpush.bf16.msra.mxu0 0
        %1114 = vmatpush.bf16.msra.mxu0 0
        %1115 = vmatpush.bf16.msra.mxu0 %v1106
        %1116 = vmatmul.bf16.gmra.mxu0 %v1103
        %v1117 = vpop.f32.mrf.mxu0
        %v1118 = vadd.f32 0.0, %v1117
        %v1119 = vpop.f32.mrf.mxu0
        %1120 = vdwg.mxu0
        %1121 = vrot.lane.b32.xlu0 %v861, 64
        %v1122 = vpop.permute.xlu0 %1121
        %v1124 = vsel %vm817, %v1072, 0
        %v1127 = vsel %vm1083, %v1122, 0
        %1129 = vmatpush.bf16.msra.mxu0 0
        %1130 = vmatpush.bf16.msra.mxu0 0
        %1131 = vmatpush.bf16.msra.mxu0 0
        %1132 = vmatpush.bf16.msra.mxu0 0
        %1133 = vmatpush.bf16.msra.mxu0 0
        %1134 = vmatpush.bf16.msra.mxu0 0
        %1135 = vmatpush.bf16.msra.mxu0 0
        %1136 = vmatpush.bf16.msra.mxu0 %v1127
        %1137 = vmatmul.bf16.gmra.mxu0 %v1124
        %v1138 = vpop.f32.mrf.mxu0
        %v1139 = vadd.f32 0.0, %v1138
        %v1140 = vpop.f32.mrf.mxu0
        %1141 = vdwg.mxu0
        %1142 = vrot.lane.b32.xlu0 %v884, 64
        %v1143 = vpop.permute.xlu0 %1142
        %v1145 = vsel %vm817, %v1073, 0
        %v1148 = vsel %vm1083, %v1143, 0
        %1150 = vmatpush.bf16.msra.mxu0 0
        %1151 = vmatpush.bf16.msra.mxu0 0
        %1152 = vmatpush.bf16.msra.mxu0 0
        %1153 = vmatpush.bf16.msra.mxu0 0
        %1154 = vmatpush.bf16.msra.mxu0 0
        %1155 = vmatpush.bf16.msra.mxu0 0
        %1156 = vmatpush.bf16.msra.mxu0 0
        %1157 = vmatpush.bf16.msra.mxu0 %v1148
        %1158 = vmatmul.bf16.gmra.mxu0 %v1145
        %v1159 = vpop.f32.mrf.mxu0
        %v1160 = vadd.f32 0.0, %v1159
        %v1161 = vpop.f32.mrf.mxu0
        %1162 = vdwg.mxu0
        %1163 = vrot.lane.b32.xlu0 %v907, 64
        %v1164 = vpop.permute.xlu0 %1163
        %v1166 = vsel %vm817, %v1074, 0
        %v1169 = vsel %vm1083, %v1164, 0
        %1171 = vmatpush.bf16.msra.mxu0 0
        %1172 = vmatpush.bf16.msra.mxu0 0
        %1173 = vmatpush.bf16.msra.mxu0 0
        %1174 = vmatpush.bf16.msra.mxu0 0
        %1175 = vmatpush.bf16.msra.mxu0 0
        %1176 = vmatpush.bf16.msra.mxu0 0
        %1177 = vmatpush.bf16.msra.mxu0 0
        %1178 = vmatpush.bf16.msra.mxu0 %v1169
        %1179 = vmatmul.bf16.gmra.mxu0 %v1166
        %v1180 = vpop.f32.mrf.mxu0
        %v1181 = vadd.f32 0.0, %v1180
        %v1182 = vpop.f32.mrf.mxu0
        %1183 = vdwg.mxu0
        %1184 = vrot.lane.b32.xlu0 %v930, 64
        %v1185 = vpop.permute.xlu0 %1184
        %v1187 = vsel %vm817, %v1075, 0
        %v1190 = vsel %vm1083, %v1185, 0
        %1192 = vmatpush.bf16.msra.mxu0 0
        %1193 = vmatpush.bf16.msra.mxu0 0
        %1194 = vmatpush.bf16.msra.mxu0 0
        %1195 = vmatpush.bf16.msra.mxu0 0
        %1196 = vmatpush.bf16.msra.mxu0 0
        %1197 = vmatpush.bf16.msra.mxu0 0
        %1198 = vmatpush.bf16.msra.mxu0 0
        %1199 = vmatpush.bf16.msra.mxu0 %v1190
        %1200 = vmatmul.bf16.gmra.mxu0 %v1187
        %v1201 = vpop.f32.mrf.mxu0
        %v1202 = vadd.f32 0.0, %v1201
        %v1203 = vpop.f32.mrf.mxu0
        %1204 = vdwg.mxu0
        %1205 = vrot.lane.b32.xlu0 %v953, 64
        %v1206 = vpop.permute.xlu0 %1205
        %v1208 = vsel %vm817, %v1076, 0
        %v1211 = vsel %vm1083, %v1206, 0
        %1213 = vmatpush.bf16.msra.mxu0 0
        %1214 = vmatpush.bf16.msra.mxu0 0
        %1215 = vmatpush.bf16.msra.mxu0 0
        %1216 = vmatpush.bf16.msra.mxu0 0
        %1217 = vmatpush.bf16.msra.mxu0 0
        %1218 = vmatpush.bf16.msra.mxu0 0
        %1219 = vmatpush.bf16.msra.mxu0 0
        %1220 = vmatpush.bf16.msra.mxu0 %v1211
        %1221 = vmatmul.bf16.gmra.mxu0 %v1208
        %v1222 = vpop.f32.mrf.mxu0
        %v1223 = vadd.f32 0.0, %v1222
        %v1224 = vpop.f32.mrf.mxu0
        %1225 = vdwg.mxu0
        %1226 = vrot.lane.b32.xlu0 %v976, 64
        %v1227 = vpop.permute.xlu0 %1226
        %v1229 = vsel %vm817, %v1077, 0
        %v1232 = vsel %vm1083, %v1227, 0
        %1234 = vmatpush.bf16.msra.mxu0 0
        %1235 = vmatpush.bf16.msra.mxu0 0
        %1236 = vmatpush.bf16.msra.mxu0 0
        %1237 = vmatpush.bf16.msra.mxu0 0
        %1238 = vmatpush.bf16.msra.mxu0 0
        %1239 = vmatpush.bf16.msra.mxu0 0
        %1240 = vmatpush.bf16.msra.mxu0 0
        %1241 = vmatpush.bf16.msra.mxu0 %v1232
        %1242 = vmatmul.bf16.gmra.mxu0 %v1229
        %v1243 = vpop.f32.mrf.mxu0
        %v1244 = vadd.f32 0.0, %v1243
        %v1245 = vpop.f32.mrf.mxu0
        %1246 = vdwg.mxu0
        %v1247 = vrcp.pop %v1048
        %v1248 = vrcp.pop %v1051
        %v1249 = vrcp.pop %v1054
        %v1250 = vrcp.pop %v1057
        %v1251 = vrcp.pop %v1060
        %v1252 = vrcp.pop %v1063
        %v1253 = vrcp.pop %v1066
        %v1254 = vrcp.pop %v1069
        %v1255 = vmul.f32 %v1097, %v1247
        %v1256 = vmul.f32 %v1118, %v1248
        %v1257 = vmul.f32 %v1139, %v1249
        %v1258 = vmul.f32 %v1160, %v1250
        %v1259 = vmul.f32 %v1181, %v1251
        %v1260 = vmul.f32 %v1202, %v1252
        %v1261 = vmul.f32 %v1223, %v1253
        %v1262 = vmul.f32 %v1244, %v1254
        %1264 = vrot.lane.b32.xlu0 %v1256, 8
        %v1265 = vpop.permute.xlu0 %1264
        %1268 = vrot.lane.b32.xlu0 %v1257, 16
        %v1269 = vpop.permute.xlu0 %1268
        %1272 = vrot.lane.b32.xlu0 %v1258, 24
        %v1273 = vpop.permute.xlu0 %1272
        %v1275 = vsel %vm817, %v1255, %v1265
        %vm1276 = vcmask 130048
        %v1277 = vsel %vm1276, %v1275, %v1269
        %vm1278 = vcmask 195584
        %v1279 = vsel %vm1278, %v1277, %v1273
        %1281 = vrot.lane.b32.xlu0 %v1260, 8
        %v1282 = vpop.permute.xlu0 %1281
        %1285 = vrot.lane.b32.xlu0 %v1261, 16
        %v1286 = vpop.permute.xlu0 %1285
        %1289 = vrot.lane.b32.xlu0 %v1262, 24
        %v1290 = vpop.permute.xlu0 %1289
        %v1292 = vsel %vm817, %v1259, %v1282
        %v1293 = vsel %vm1276, %v1292, %v1286
        %v1294 = vsel %vm1278, %v1293, %v1290
        %v1295 = vpack.c.bf16 %v1294, %v1279
        %v1296 = vld [vmem:[%s688] sm:$0xf]
        %v1297 = vld [vmem:[%s688 + $0x4] sm:$0xf]
        %v1298 = vld [vmem:[%s688 + $0x8] sm:$0xf]
        %v1299 = vld [vmem:[%s688 + $0xc] sm:$0xf]
        %v1300 = vld [vmem:[%s691] sm:$0x1]
        %v1302 = vperm.slane %v1300, 0
        %v1308 = vunpack.c.l.b16 %v1296
        %v1309 = vunpack.c.l.b16 %v1297
        %v1310 = vunpack.c.l.b16 %v1298
        %v1311 = vunpack.c.l.b16 %v1299
        %v1312 = vpack.c.b16 %v1309, %v1308
        %v1313 = vpack.c.b16 %v1311, %v1310
        %v1317 = vsel %vm755, %v1295, 0
        %1319 = vmatpush.bf16.msra.mxu0 0
        %1320 = vmatpush.bf16.msra.mxu0 0
        %1321 = vmatpush.bf16.msra.mxu0 0
        %1322 = vmatpush.bf16.msra.mxu0 0
        %1323 = vmatpush.bf16.msra.mxu0 0
        %1324 = vmatpush.bf16.msra.mxu0 0
        %1325 = vmatpush.bf16.msra.mxu0 %v1313
        %1326 = vmatpush.bf16.msra.mxu0 %v1312
        %1327 = vmatmul.bf16.gmra.mxu0 %v1317
        %v1328 = vpop.f32.mrf.mxu0
        %v1329 = vadd.f32 %v1302, %v1328
        %v1330 = vpop.f32.mrf.mxu0
        %v1331 = vadd.f32 %v1302, %v1330
        %1332 = vdwg.mxu0
        %v1333 = vadd.f32 %v724, %v1329
        %v1334 = vadd.f32 %v725, %v1331
        %v1335 = vld [vmem:[%s694] sm:$0x1]
        %v1336 = vld [vmem:[%s587] sm:$0x1]
        %v1337 = vsel %vm755, %v1333, 0.0
        %1338 = vadd.xlane.f32.xlu0 %v1337
        %v1339 = vpop.xlane.xlu0 %1338
        %v1340 = vsel %vm755, %v1334, 0.0
        %1341 = vadd.xlane.f32.xlu0 %v1340
        %v1342 = vpop.xlane.xlu0 %1341
        %v1343 = vrcp.pop 32.0
        %v1344 = vmul.f32 32.0, %v1343
        %v1345 = vsub.f32 1.0, %v1344
        %v1346 = vmul.f32 %v1343, %v1345
        %v1347 = vadd.f32 %v1343, %v1346
        %vm1348 = vweird.f32 %v1343
        %v1349 = vsel %vm1348, %v1343, %v1347
        %v1350 = vmul.f32 %v1339, %v1349
        %v1351 = vmul.f32 %v1342, %v1349
        %v1352 = vsub.f32 %v1333, %v1350
        %v1353 = vsub.f32 %v1334, %v1351
        %v1354 = vmul.f32 %v1352, %v1352
        %v1355 = vmul.f32 %v1353, %v1353
        %v1356 = vsel %vm755, %v1354, 0.0
        %1357 = vadd.xlane.f32.xlu0 %v1356
        %v1358 = vpop.xlane.xlu0 %1357
        %v1359 = vsel %vm755, %v1355, 0.0
        %1360 = vadd.xlane.f32.xlu0 %v1359
        %v1361 = vpop.xlane.xlu0 %1360
        %v1362 = vmul.f32 %v1358, %v1349
        %v1363 = vmul.f32 %v1361, %v1349
        %v1364 = vadd.f32 %v1362, 1e-05
        %v1365 = vadd.f32 %v1363, 1e-05
        %v1366 = vrsqrt.pop %v1364
        %v1367 = vmul.f32 %v1366, %v1364
        %v1368 = vmul.f32 %v1367, %v1366
        %v1369 = vmul.f32 0.5, %v1368
        %v1370 = vsub.f32 1.5, %v1369
        %v1371 = vmul.f32 %v1366, %v1370
        %vm1372 = vweird.f32 %v1364
        %vm1373 = vweird.f32 %v1366
        %vm1374 = vmor %vm1372, %vm1373
        %v1375 = vsel %vm1374, %v1366, %v1371
        %v1376 = vrsqrt.pop %v1365
        %v1377 = vmul.f32 %v1376, %v1365
        %v1378 = vmul.f32 %v1377, %v1376
        %v1379 = vmul.f32 0.5, %v1378
        %v1380 = vsub.f32 1.5, %v1379
        %v1381 = vmul.f32 %v1376, %v1380
        %vm1382 = vweird.f32 %v1365
        %vm1383 = vweird.f32 %v1376
        %vm1384 = vmor %vm1382, %vm1383
        %v1385 = vsel %vm1384, %v1376, %v1381
        %v1386 = vmul.f32 %v1352, %v1375
        %v1387 = vmul.f32 %v1353, %v1385
        %v1389 = vperm.slane %v1335, 0
        %v1391 = vmul.f32 %v1386, %v1389
        %v1392 = vmul.f32 %v1387, %v1389
        %v1394 = vperm.slane %v1336, 0
        %v1396 = vadd.f32 %v1391, %v1394
        %v1397 = vadd.f32 %v1392, %v1394
        %v1398 = vpack.c.bf16 %v1397, %v1396
        %v1399 = vld [vmem:[%s699] sm:$0xf]
        %v1400 = vld [vmem:[%s699 + $0x4] sm:$0xf]
        %v1401 = vld [vmem:[%s699 + $0x8] sm:$0xf]
        %v1402 = vld [vmem:[%s699 + $0xc] sm:$0xf]
        %v1403 = vld [vmem:[%s702] sm:$0x1]
        %v1405 = vperm.slane %v1403, 0
        %v1411 = vunpack.c.l.b16 %v1399
        %v1412 = vunpack.c.l.b16 %v1400
        %v1413 = vunpack.c.l.b16 %v1401
        %v1414 = vunpack.c.l.b16 %v1402
        %v1415 = vpack.c.b16 %v1412, %v1411
        %v1416 = vpack.c.b16 %v1414, %v1413
        %v1420 = vsel %vm755, %v1398, 0
        %1422 = vmatpush.bf16.msra.mxu0 0
        %1423 = vmatpush.bf16.msra.mxu0 0
        %1424 = vmatpush.bf16.msra.mxu0 0
        %1425 = vmatpush.bf16.msra.mxu0 0
        %1426 = vmatpush.bf16.msra.mxu0 0
        %1427 = vmatpush.bf16.msra.mxu0 0
        %1428 = vmatpush.bf16.msra.mxu0 %v1416
        %1429 = vmatpush.bf16.msra.mxu0 %v1415
        %1430 = vmatmul.bf16.gmra.mxu0 %v1420
        %v1431 = vpop.f32.mrf.mxu0
        %v1432 = vadd.f32 %v1405, %v1431
        %v1433 = vpop.f32.mrf.mxu0
        %v1434 = vadd.f32 %v1405, %v1433
        %1435 = vdwg.mxu0
        %v1436 = vmax.f32 %v1432, 0.0
        %v1437 = vmax.f32 %v1434, 0.0
        %v1438 = vpack.c.bf16 %v1437, %v1436
        %v1439 = vld [vmem:[%s707] sm:$0xf]
        %v1440 = vld [vmem:[%s707 + $0x4] sm:$0xf]
        %v1441 = vld [vmem:[%s707 + $0x8] sm:$0xf]
        %v1442 = vld [vmem:[%s707 + $0xc] sm:$0xf]
        %v1443 = vld [vmem:[%s707 + $0x10] sm:$0xf]
        %v1444 = vld [vmem:[%s707 + $0x14] sm:$0xf]
        %v1445 = vld [vmem:[%s707 + $0x18] sm:$0xf]
        %v1446 = vld [vmem:[%s707 + $0x1c] sm:$0xf]
        %v1447 = vld [vmem:[%s710] sm:$0x1]
        %v1449 = vperm.slane %v1447, 0
        %v1459 = vunpack.c.l.b16 %v1439
        %v1460 = vunpack.c.l.b16 %v1440
        %v1461 = vunpack.c.l.b16 %v1441
        %v1462 = vunpack.c.l.b16 %v1442
        %v1463 = vunpack.c.l.b16 %v1443
        %v1464 = vunpack.c.l.b16 %v1444
        %v1465 = vunpack.c.l.b16 %v1445
        %v1466 = vunpack.c.l.b16 %v1446
        %v1467 = vpack.c.b16 %v1460, %v1459
        %v1468 = vpack.c.b16 %v1462, %v1461
        %v1469 = vpack.c.b16 %v1464, %v1463
        %v1470 = vpack.c.b16 %v1466, %v1465
        %vm1475 = vcmask 523264
        %v1477 = vsel %vm1475, %v1438, 0
        %1479 = vmatpush.bf16.msra.mxu0 0
        %1480 = vmatpush.bf16.msra.mxu0 0
        %1481 = vmatpush.bf16.msra.mxu0 0
        %1482 = vmatpush.bf16.msra.mxu0 0
        %1483 = vmatpush.bf16.msra.mxu0 %v1470
        %1484 = vmatpush.bf16.msra.mxu0 %v1469
        %1485 = vmatpush.bf16.msra.mxu0 %v1468
        %1486 = vmatpush.bf16.msra.mxu0 %v1467
        %1487 = vmatmul.bf16.gmra.mxu0 %v1477
        %v1488 = vpop.f32.mrf.mxu0
        %v1489 = vadd.f32 %v1449, %v1488
        %v1490 = vpop.f32.mrf.mxu0
        %v1491 = vadd.f32 %v1449, %v1490
        %1492 = vdwg.mxu0
        %v1493 = vadd.f32 %v1396, %v1489
        %v1494 = vadd.f32 %v1397, %v1491
        %v1495 = vld [vmem:[%s713] sm:$0x1]
        %v1496 = vld [vmem:[%s596] sm:$0x1]
        %v1497 = vsel %vm755, %v1493, 0.0
        %1498 = vadd.xlane.f32.xlu0 %v1497
        %v1499 = vpop.xlane.xlu0 %1498
        %v1500 = vsel %vm755, %v1494, 0.0
        %1501 = vadd.xlane.f32.xlu0 %v1500
        %v1502 = vpop.xlane.xlu0 %1501
        %v1503 = vmul.f32 %v1499, %v1349
        %v1504 = vmul.f32 %v1502, %v1349
        %v1505 = vsub.f32 %v1493, %v1503
        %v1506 = vsub.f32 %v1494, %v1504
        %v1507 = vmul.f32 %v1505, %v1505
        %v1508 = vmul.f32 %v1506, %v1506
        %v1509 = vsel %vm755, %v1507, 0.0
        %1510 = vadd.xlane.f32.xlu0 %v1509
        %v1511 = vpop.xlane.xlu0 %1510
        %v1512 = vsel %vm755, %v1508, 0.0
        %1513 = vadd.xlane.f32.xlu0 %v1512
        %v1514 = vpop.xlane.xlu0 %1513
        %v1515 = vmul.f32 %v1511, %v1349
        %v1516 = vmul.f32 %v1514, %v1349
        %v1517 = vadd.f32 %v1515, 1e-05
        %v1518 = vadd.f32 %v1516, 1e-05
        %v1519 = vrsqrt.pop %v1517
        %v1520 = vmul.f32 %v1519, %v1517
        %v1521 = vmul.f32 %v1520, %v1519
        %v1522 = vmul.f32 0.5, %v1521
        %v1523 = vsub.f32 1.5, %v1522
        %v1524 = vmul.f32 %v1519, %v1523
        %vm1525 = vweird.f32 %v1517
        %vm1526 = vweird.f32 %v1519
        %vm1527 = vmor %vm1525, %vm1526
        %v1528 = vsel %vm1527, %v1519, %v1524
        %v1529 = vrsqrt.pop %v1518
        %v1530 = vmul.f32 %v1529, %v1518
        %v1531 = vmul.f32 %v1530, %v1529
        %v1532 = vmul.f32 0.5, %v1531
        %v1533 = vsub.f32 1.5, %v1532
        %v1534 = vmul.f32 %v1529, %v1533
        %vm1535 = vweird.f32 %v1518
        %vm1536 = vweird.f32 %v1529
        %vm1537 = vmor %vm1535, %vm1536
        %v1538 = vsel %vm1537, %v1529, %v1534
        %v1539 = vmul.f32 %v1505, %v1528
        %v1540 = vmul.f32 %v1506, %v1538
        %v1542 = vperm.slane %v1495, 0
        %v1544 = vmul.f32 %v1539, %v1542
        %v1545 = vmul.f32 %v1540, %v1542
        %v1547 = vperm.slane %v1496, 0
        %v1549 = vadd.f32 %v1544, %v1547
        %v1550 = vadd.f32 %v1545, %v1547
        %1551 = vst.msk [vmem:[#allocation2] sm:$0xff] %vm755, %v1549
        %1552 = vst.msk [vmem:[#allocation2 + $0x8] sm:$0xff] %vm755, %v1550
        %p1553 = scmp.eq.s32.totalorder %s28, 1
        // Predicated region
        $region101: #{tpu_custom_call.1} parent=75 // pred_check
          %p1554 = pneg %p1553
        $region102: #{tpu_custom_call.1} parent=75 // pred_check_branch
          %1556 = sbr.rel (%p1554) target = $region104
        $region103: #{tpu_custom_call.1} parent=75 // pred_region
          %v1557 = vpack.c.bf16 %v1549, %v1549
          %v1558 = vpack.c.bf16 %v1550, %v1550
          %vm1559 = vcmask 257024
          %1560 = vst.msk [vmem:[#allocation11] sm:$0xf] %vm1559, %v1557
          %1561 = vst.msk [vmem:[#allocation11 + $0x4] sm:$0xf] %vm1559, %v1558
        $region104: #{tpu_custom_call.1} parent=75 // pred_fallthru
          _
        // Predicated region
        $region105: #{tpu_custom_call.1} parent=75 // pred_check
          %p1562 = pneg %p395
        $region106: #{tpu_custom_call.1} parent=75 // pred_check_branch
          %1564 = sbr.rel (%p1562) target = $region108
        $region107: #{tpu_custom_call.1} parent=75 // pred_region
          %1566 = vsyncadd [#allocation5], 0
          %s1567 = sshll.u32 [#allocation11], 4
          %s1568 = int_to_ptr.vmem [resolvable:$true] %s1567
          %s1569 = sshll.u32 %s14, 4
          %s1570 = int_to_ptr.hbm [resolvable:$true] %s1569
          %1575 = dma.vmem_to_hbm [thread:$0]  %s1568, 128, %s1570, [#allocation5], 64, 64, 4
        $region108: #{tpu_custom_call.1} parent=75 // pred_fallthru
          _
        // Predicated region
        $region109: #{tpu_custom_call.1} parent=75 // pred_check
          %p1576 = pneg %p395
        $region110: #{tpu_custom_call.1} parent=75 // pred_check_branch
          %1578 = sbr.rel (%p1576) target = $region112
        $region111: #{tpu_custom_call.1} parent=75 // pred_region
          %1580 = dma.done [#allocation5], 128
        $region112: #{tpu_custom_call.1} parent=75 // pred_fallthru
          _
      $region76: #{tpu_custom_call.1} parent=5 // pred_fallthru
        _
      %p1581 = scmp.le.s32.totalorder 2, %s23
      // Predicated region
      $region113: #{tpu_custom_call.1} parent=5 // pred_check
        %p1582 = pneg %p1581
      $region114: #{tpu_custom_call.1} parent=5 // pred_check_branch
        %1584 = sbr.rel (%p1582) target = $region116
      $region115: #{tpu_custom_call.1} parent=5 // pred_region
        %s1585 = ssub.s32 %s23, 2
      $region116: #{tpu_custom_call.1} parent=5 // pred_fallthru
        _
    $region6: #{tpu_custom_call.1} parent=1 // loop_footer
      %s27 = sadd.s32 1, %s23
    $region7: #{tpu_custom_call.1} parent=1 // loop_footer_branch
      %22 = sbr.rel target = $region3
    $region8: #{tpu_custom_call.1} parent=1 // loop_exit
      _
    %1586 = vsyncpa [#allocation4], 1
    %s1587 = scalar_lea.sflag [#allocation4], 1
    %1588 = vsyncpa %s1587, 1
    %1589 = vsyncpa [#allocation7], 1
    %1590 = vsyncpa [#allocation5], 1
    %s1591 = scalar_lea.sflag [#allocation5], 1
    %1592 = vsyncpa %s1591, 1

</llo_original>
